<compile_context>
chip_gen: v7x
topology: tpu7x:2x2x1
jax: 0.10.0
libtpu: 0.0.40
codegen_flags: <defaults>
</compile_context>

<pallas_src>
import functools
import math

import jax
import jax.numpy as jnp
from jax import lax
from jax.experimental import pallas as pl
from jax.experimental.pallas import tpu as pltpu

LN_EPS = 1e-12          # BERT LayerNorm eps
MASK_NEG = -10000.0     # HF BERT extended-attention-mask value


class BertConfig:
    vocab_size = 100
    hidden = 32
    num_heads = 2
    num_layers = 2
    intermediate = 64
    max_position = 32
    type_vocab = 2


# ----------------------------- kernel helpers ------------------------------

def _gelu_tanh(x):
    # TODO(synk): HF BERT uses the exact erf-GELU; the tanh approximation is
    # kept for a Mosaic-friendly EUP-tanh lowering (tiny numeric difference).
    c = math.sqrt(2.0 / math.pi)
    return 0.5 * x * (1.0 + jnp.tanh(c * (x + 0.044715 * x * x * x)))


def _layernorm(h, g, b):
    mu = jnp.mean(h, axis=-1, keepdims=True)
    var = jnp.mean(jnp.square(h - mu), axis=-1, keepdims=True)
    return (h - mu) * lax.rsqrt(var + LN_EPS) * g + b


# ------------------------- fused encoder kernel ----------------------------

def _encoder_kernel(x_ref, bias_ref,
                    wqkv_ref, bqkv_ref, wo_ref, bo_ref, ln1g_ref, ln1b_ref,
                    w1_ref, b1_ref, w2_ref, b2_ref, ln2g_ref, ln2b_ref,
                    embg_ref, embb_ref,
                    o_ref, *, num_layers, num_heads, head_dim):
    H = num_heads * head_dim
    scale = 1.0 / math.sqrt(head_dim)

    x = x_ref[0].astype(jnp.float32)           # (S, H), one batch element
    bias = bias_ref[0]                         # (1, S) = (1 - mask) * -1e4

    # Embedding LayerNorm (residual-free path).
    x = _layernorm(x, embg_ref[...], embb_ref[...])

    for l in range(num_layers):                # L=2, statically unrolled
        # ---------------- self-attention (fused QKV projection) ------------
        qkv = (jnp.dot(x, wqkv_ref[l], preferred_element_type=jnp.float32)
               + bqkv_ref[l])                  # (S, 3H)
        wo_l = wo_ref[l]                       # (H, H)
        attn = None
        for h in range(num_heads):             # nH=2, statically unrolled
            lo = h * head_dim
            qh = qkv[:, lo:lo + head_dim]                   # (S, Dh)
            kh = qkv[:, H + lo:H + lo + head_dim]
            vh = qkv[:, 2 * H + lo:2 * H + lo + head_dim]
            # scores = q @ k^T / sqrt(Dh) + mask_bias   (contraction on Dh)
            s = lax.dot_general(qh, kh, (((1,), (1,)), ((), ())),
                                preferred_element_type=jnp.float32)
            s = s * scale + bias                            # (S, S)
            m = jnp.max(s, axis=-1, keepdims=True)
            e = jnp.exp(s - m)
            p = e * pl.reciprocal(jnp.sum(e, axis=-1, keepdims=True),
                                  approx=True)
            ctx_h = jnp.dot(p, vh, preferred_element_type=jnp.float32)  # (S, Dh)
            # Output projection folded per head (block matmul) -> lane-dense (S, H)
            part = jnp.dot(ctx_h, wo_l[lo:lo + head_dim, :],
                           preferred_element_type=jnp.float32)
            attn = part if attn is None else attn + part
        attn = attn + bo_ref[l]
        x = _layernorm(attn + x, ln1g_ref[l], ln1b_ref[l])

        # ----------------------------- FFN ----------------------------------
        h1 = _gelu_tanh(jnp.dot(x, w1_ref[l], preferred_element_type=jnp.float32)
                        + b1_ref[l])
        h2 = jnp.dot(h1, w2_ref[l], preferred_element_type=jnp.float32) + b2_ref[l]
        x = _layernorm(h2 + x, ln2g_ref[l], ln2b_ref[l])

    o_ref[0] = x.astype(o_ref.dtype)


def bert_encoder(x, bias, params, cfg):
    """x: (B, S, H) embeddings, bias: (B, 1, S) additive mask. Returns (B, S, H)."""
    B, S, H = x.shape
    L, nH, I = cfg.num_layers, cfg.num_heads, cfg.intermediate
    Dh = H // nH

    def full(shape):
        zeros = (0,) * len(shape)
        return pl.BlockSpec(shape, lambda b: zeros)

    kernel = functools.partial(_encoder_kernel, num_layers=L,
                               num_heads=nH, head_dim=Dh)
    return pl.pallas_call(
        kernel,
        out_shape=jax.ShapeDtypeStruct((B, S, H), x.dtype),
        grid=(B,),
        in_specs=[
            pl.BlockSpec((1, S, H), lambda b: (b, 0, 0)),   # activations (per batch)
            pl.BlockSpec((1, 1, S), lambda b: (b, 0, 0)),   # attention bias
            full((L, H, 3 * H)), full((L, 1, 3 * H)),       # fused QKV
            full((L, H, H)),     full((L, 1, H)),           # attn output proj
            full((L, 1, H)),     full((L, 1, H)),           # LN1
            full((L, H, I)),     full((L, 1, I)),           # FFN up
            full((L, I, H)),     full((L, 1, H)),           # FFN down
            full((L, 1, H)),     full((L, 1, H)),           # LN2
            full((1, H)),        full((1, H)),              # embedding LN
        ],
        out_specs=pl.BlockSpec((1, S, H), lambda b: (b, 0, 0)),
        compiler_params=pltpu.CompilerParams(dimension_semantics=("parallel",)),
    )(x, bias,
      params["wqkv"], params["bqkv"], params["wo"], params["bo"],
      params["ln1_g"], params["ln1_b"],
      params["w1"], params["b1"], params["w2"], params["b2"],
      params["ln2_g"], params["ln2_b"],
      params["emb_ln_g"], params["emb_ln_b"])


# ------------------------------ model glue ---------------------------------

def init_bert_params(key, cfg):
    L, H, I = cfg.num_layers, cfg.hidden, cfg.intermediate
    keys = jax.random.split(key, 7)

    def w(k, shape, scale=0.02):
        return scale * jax.random.normal(k, shape, jnp.float32)

    return {
        "word_emb": w(keys[0], (cfg.vocab_size, H)),
        "pos_emb": w(keys[1], (cfg.max_position, H)),
        "type_emb": w(keys[2], (cfg.type_vocab, H)),
        "emb_ln_g": jnp.ones((1, H), jnp.float32),
        "emb_ln_b": jnp.zeros((1, H), jnp.float32),
        # Per-layer weights stacked on a leading layer axis; Q/K/V pre-fused.
        "wqkv": w(keys[3], (L, H, 3 * H)),
        "bqkv": jnp.zeros((L, 1, 3 * H), jnp.float32),
        "wo": w(keys[4], (L, H, H)),
        "bo": jnp.zeros((L, 1, H), jnp.float32),
        "ln1_g": jnp.ones((L, 1, H), jnp.float32),
        "ln1_b": jnp.zeros((L, 1, H), jnp.float32),
        "w1": w(keys[5], (L, H, I)),
        "b1": jnp.zeros((L, 1, I), jnp.float32),
        "w2": w(keys[6], (L, I, H)),
        "b2": jnp.zeros((L, 1, H), jnp.float32),
        "ln2_g": jnp.ones((L, 1, H), jnp.float32),
        "ln2_b": jnp.zeros((L, 1, H), jnp.float32),
    }


def triplet_bert_forward(params, cfg, input_ids, attention_mask):
    """Equivalent of TripletBERTModel.forward: last_hidden_state[:, 0, :]."""
    B, S = input_ids.shape

    # Embedding gathers stay in plain XLA (glue). token_type_ids default to 0
    # in the reference model, so the type embedding is row 0 everywhere.
    emb = (params["word_emb"][input_ids]
           + params["pos_emb"][:S][None, :, :]
           + params["type_emb"][0][None, None, :])                 # (B, S, H)

    # HF extended attention mask: (1 - mask) * -10000, added per key position.
    bias = (1.0 - attention_mask.astype(jnp.float32))[:, None, :] * MASK_NEG  # (B,1,S)

    hidden = bert_encoder(emb.astype(jnp.float32), bias, params, cfg)  # (B, S, H)
    return hidden[:, 0, :]                                             # CLS token


if __name__ == "__main__":
    cfg = BertConfig()
    key = jax.random.PRNGKey(0)
    pkey, ikey = jax.random.split(key)

    params = init_bert_params(pkey, cfg)

    B, S = 2, 8
    input_ids = jax.random.randint(ikey, (B, S), 0, cfg.vocab_size, dtype=jnp.int32)
    attention_mask = jnp.array([[1, 1, 1, 1, 1, 1, 1, 1],
                                [1, 1, 1, 1, 1, 1, 0, 0]], dtype=jnp.int32)

    fwd = jax.jit(lambda p, ids, mask: triplet_bert_forward(p, cfg, ids, mask))
    cls = fwd(params, input_ids, attention_mask)
    cls = jax.block_until_ready(cls)

    assert cls.shape == (B, cfg.hidden)
    assert bool(jnp.all(jnp.isfinite(cls)))
    print("KERNEL_OK")
</pallas_src>

<mosaic_0001>
module attributes {stable_mosaic.version = 11 : i64} {
  func.func @_encoder_kernel(%arg0: i32, %arg1: memref<1x8x32xf32, #tpu.memory_space<vmem>>, %arg2: memref<1x1x8xf32, #tpu.memory_space<vmem>>, %arg3: memref<2x32x96xf32, #tpu.memory_space<vmem>>, %arg4: memref<2x1x96xf32, #tpu.memory_space<vmem>>, %arg5: memref<2x32x32xf32, #tpu.memory_space<vmem>>, %arg6: memref<2x1x32xf32, #tpu.memory_space<vmem>>, %arg7: memref<2x1x32xf32, #tpu.memory_space<vmem>>, %arg8: memref<2x1x32xf32, #tpu.memory_space<vmem>>, %arg9: memref<2x32x64xf32, #tpu.memory_space<vmem>>, %arg10: memref<2x1x64xf32, #tpu.memory_space<vmem>>, %arg11: memref<2x64x32xf32, #tpu.memory_space<vmem>>, %arg12: memref<2x1x32xf32, #tpu.memory_space<vmem>>, %arg13: memref<2x1x32xf32, #tpu.memory_space<vmem>>, %arg14: memref<2x1x32xf32, #tpu.memory_space<vmem>>, %arg15: memref<1x32xf32, #tpu.memory_space<vmem>>, %arg16: memref<1x32xf32, #tpu.memory_space<vmem>>, %arg17: memref<1x8x32xf32, #tpu.memory_space<vmem>>) attributes {dimension_semantics = [#tpu.dimension_semantics<parallel>], iteration_bounds = array<i64: 2>, scalar_prefetch = 0 : i64, scratch_operands = 0 : i64, tpu.core_type = #tpu.core_type<tc>, window_params = [{transform_indices = @transform_0, window_bounds = array<i64: 1, 8, 32>}, {transform_indices = @transform_1, window_bounds = array<i64: 1, 1, 8>}, {pipeline_mode = #tpu.pipeline_mode<synchronous>, transform_indices = @transform_2, window_bounds = array<i64: 2, 32, 96>}, {pipeline_mode = #tpu.pipeline_mode<synchronous>, transform_indices = @transform_3, window_bounds = array<i64: 2, 1, 96>}, {pipeline_mode = #tpu.pipeline_mode<synchronous>, transform_indices = @transform_4, window_bounds = array<i64: 2, 32, 32>}, {pipeline_mode = #tpu.pipeline_mode<synchronous>, transform_indices = @transform_5, window_bounds = array<i64: 2, 1, 32>}, {pipeline_mode = #tpu.pipeline_mode<synchronous>, transform_indices = @transform_6, window_bounds = array<i64: 2, 1, 32>}, {pipeline_mode = #tpu.pipeline_mode<synchronous>, transform_indices = @transform_7, window_bounds = array<i64: 2, 1, 32>}, {pipeline_mode = #tpu.pipeline_mode<synchronous>, transform_indices = @transform_8, window_bounds = array<i64: 2, 32, 64>}, {pipeline_mode = #tpu.pipeline_mode<synchronous>, transform_indices = @transform_9, window_bounds = array<i64: 2, 1, 64>}, {pipeline_mode = #tpu.pipeline_mode<synchronous>, transform_indices = @transform_10, window_bounds = array<i64: 2, 64, 32>}, {pipeline_mode = #tpu.pipeline_mode<synchronous>, transform_indices = @transform_11, window_bounds = array<i64: 2, 1, 32>}, {pipeline_mode = #tpu.pipeline_mode<synchronous>, transform_indices = @transform_12, window_bounds = array<i64: 2, 1, 32>}, {pipeline_mode = #tpu.pipeline_mode<synchronous>, transform_indices = @transform_13, window_bounds = array<i64: 2, 1, 32>}, {pipeline_mode = #tpu.pipeline_mode<synchronous>, transform_indices = @transform_14, window_bounds = array<i64: 1, 32>}, {pipeline_mode = #tpu.pipeline_mode<synchronous>, transform_indices = @transform_15, window_bounds = array<i64: 1, 32>}, {transform_indices = @transform_16, window_bounds = array<i64: 1, 8, 32>}]} {
    %c0 = arith.constant 0 : index
    %c0_0 = arith.constant 0 : index
    %c0_1 = arith.constant 0 : index
    %0 = vector.load %arg1[%c0, %c0_0, %c0_1] : memref<1x8x32xf32, #tpu.memory_space<vmem>>, vector<1x8x32xf32>
    %1 = vector.shape_cast %0 : vector<1x8x32xf32> to vector<8x32xf32>
    %c0_2 = arith.constant 0 : index
    %c0_3 = arith.constant 0 : index
    %c0_4 = arith.constant 0 : index
    %2 = vector.load %arg2[%c0_2, %c0_3, %c0_4] : memref<1x1x8xf32, #tpu.memory_space<vmem>>, vector<1x1x8xf32>
    %3 = vector.shape_cast %2 : vector<1x1x8xf32> to vector<1x8xf32>
    %c0_5 = arith.constant 0 : index
    %c0_6 = arith.constant 0 : index
    %4 = vector.load %arg15[%c0_5, %c0_6] : memref<1x32xf32, #tpu.memory_space<vmem>>, vector<1x32xf32>
    %c0_7 = arith.constant 0 : index
    %c0_8 = arith.constant 0 : index
    %5 = vector.load %arg16[%c0_7, %c0_8] : memref<1x32xf32, #tpu.memory_space<vmem>>, vector<1x32xf32>
    %cst = arith.constant dense<0.000000e+00> : vector<8xf32>
    %6 = vector.multi_reduction <add>, %1, %cst [1] : vector<8x32xf32> to vector<8xf32>
    %7 = vector.shape_cast %6 : vector<8xf32> to vector<8x1xf32>
    %cst_9 = arith.constant 3.200000e+01 : f32
    %8 = vector.broadcast %cst_9 : f32 to vector<8x1xf32>
    %9 = arith.divf %7, %8 : vector<8x1xf32>
    %10 = vector.broadcast %9 : vector<8x1xf32> to vector<8x32xf32>
    %11 = arith.subf %1, %10 : vector<8x32xf32>
    %12 = arith.mulf %11, %11 : vector<8x32xf32>
    %cst_10 = arith.constant dense<0.000000e+00> : vector<8xf32>
    %13 = vector.multi_reduction <add>, %12, %cst_10 [1] : vector<8x32xf32> to vector<8xf32>
    %14 = vector.shape_cast %13 : vector<8xf32> to vector<8x1xf32>
    %cst_11 = arith.constant 3.200000e+01 : f32
    %15 = vector.broadcast %cst_11 : f32 to vector<8x1xf32>
    %16 = arith.divf %14, %15 : vector<8x1xf32>
    %17 = vector.broadcast %9 : vector<8x1xf32> to vector<8x32xf32>
    %18 = arith.subf %1, %17 : vector<8x32xf32>
    %cst_12 = arith.constant 9.99999996E-13 : f32
    %19 = vector.broadcast %cst_12 : f32 to vector<8x1xf32>
    %20 = arith.addf %16, %19 : vector<8x1xf32>
    %21 = math.rsqrt %20 : vector<8x1xf32>
    %22 = vector.broadcast %21 : vector<8x1xf32> to vector<8x32xf32>
    %23 = arith.mulf %18, %22 : vector<8x32xf32>
    %24 = vector.broadcast %4 : vector<1x32xf32> to vector<8x32xf32>
    %25 = arith.mulf %23, %24 : vector<8x32xf32>
    %26 = vector.broadcast %5 : vector<1x32xf32> to vector<8x32xf32>
    %27 = arith.addf %25, %26 : vector<8x32xf32>
    %c0_13 = arith.constant 0 : index
    %c0_14 = arith.constant 0 : index
    %c0_15 = arith.constant 0 : index
    %28 = vector.load %arg3[%c0_13, %c0_14, %c0_15] : memref<2x32x96xf32, #tpu.memory_space<vmem>>, vector<1x32x96xf32>
    %29 = vector.shape_cast %28 : vector<1x32x96xf32> to vector<32x96xf32>
    %cst_16 = arith.constant dense<0.000000e+00> : vector<8x96xf32>
    %30 = tpu.matmul %27, %29, %cst_16 {dimension_numbers = #tpu.dot_dimension_numbers<[1], [0], [0], [1], [0, 0, 1, 1], [], []>} : vector<8x32xf32>, vector<32x96xf32>, vector<8x96xf32> -> vector<8x96xf32>
    %c0_17 = arith.constant 0 : index
    %c0_18 = arith.constant 0 : index
    %c0_19 = arith.constant 0 : index
    %31 = vector.load %arg4[%c0_17, %c0_18, %c0_19] : memref<2x1x96xf32, #tpu.memory_space<vmem>>, vector<1x1x96xf32>
    %32 = vector.shape_cast %31 : vector<1x1x96xf32> to vector<1x96xf32>
    %33 = vector.broadcast %32 : vector<1x96xf32> to vector<8x96xf32>
    %34 = arith.addf %30, %33 : vector<8x96xf32>
    %c0_20 = arith.constant 0 : index
    %c0_21 = arith.constant 0 : index
    %c0_22 = arith.constant 0 : index
    %35 = vector.load %arg5[%c0_20, %c0_21, %c0_22] : memref<2x32x32xf32, #tpu.memory_space<vmem>>, vector<1x32x32xf32>
    %36 = vector.shape_cast %35 : vector<1x32x32xf32> to vector<32x32xf32>
    %37 = vector.extract_strided_slice %34 {offsets = [0, 0], sizes = [8, 16], strides = [1, 1]} : vector<8x96xf32> to vector<8x16xf32>
    %38 = vector.extract_strided_slice %34 {offsets = [0, 32], sizes = [8, 16], strides = [1, 1]} : vector<8x96xf32> to vector<8x16xf32>
    %39 = vector.extract_strided_slice %34 {offsets = [0, 64], sizes = [8, 16], strides = [1, 1]} : vector<8x96xf32> to vector<8x16xf32>
    %cst_23 = arith.constant dense<0.000000e+00> : vector<8x8xf32>
    %40 = tpu.matmul %37, %38, %cst_23 {dimension_numbers = #tpu.dot_dimension_numbers<[1], [1], [0], [0], [0, 0, 1, 0], [], []>} : vector<8x16xf32>, vector<8x16xf32>, vector<8x8xf32> -> vector<8x8xf32>
    %cst_24 = arith.constant 2.500000e-01 : f32
    %41 = vector.broadcast %cst_24 : f32 to vector<8x8xf32>
    %42 = arith.mulf %40, %41 : vector<8x8xf32>
    %43 = vector.broadcast %3 : vector<1x8xf32> to vector<8x8xf32>
    %44 = arith.addf %42, %43 : vector<8x8xf32>
    %cst_25 = arith.constant dense<0xFF800000> : vector<8xf32>
    %45 = vector.multi_reduction <maximumf>, %44, %cst_25 [1] : vector<8x8xf32> to vector<8xf32>
    %46 = vector.shape_cast %45 : vector<8xf32> to vector<8x1xf32>
    %47 = vector.broadcast %46 : vector<8x1xf32> to vector<8x8xf32>
    %48 = arith.subf %44, %47 : vector<8x8xf32>
    %49 = math.exp %48 : vector<8x8xf32>
    %cst_26 = arith.constant dense<0.000000e+00> : vector<8xf32>
    %50 = vector.multi_reduction <add>, %49, %cst_26 [1] : vector<8x8xf32> to vector<8xf32>
    %51 = vector.shape_cast %50 : vector<8xf32> to vector<8x1xf32>
    %52 = tpu.reciprocal %51 {approx = true} : vector<8x1xf32> -> vector<8x1xf32>
    %53 = vector.broadcast %52 : vector<8x1xf32> to vector<8x8xf32>
    %54 = arith.mulf %49, %53 : vector<8x8xf32>
    %cst_27 = arith.constant dense<0.000000e+00> : vector<8x16xf32>
    %55 = tpu.matmul %54, %39, %cst_27 {dimension_numbers = #tpu.dot_dimension_numbers<[1], [0], [0], [1], [0, 0, 1, 1], [], []>} : vector<8x8xf32>, vector<8x16xf32>, vector<8x16xf32> -> vector<8x16xf32>
    %56 = vector.extract_strided_slice %36 {offsets = [0, 0], sizes = [16, 32], strides = [1, 1]} : vector<32x32xf32> to vector<16x32xf32>
    %cst_28 = arith.constant dense<0.000000e+00> : vector<8x32xf32>
    %57 = tpu.matmul %55, %56, %cst_28 {dimension_numbers = #tpu.dot_dimension_numbers<[1], [0], [0], [1], [0, 0, 1, 1], [], []>} : vector<8x16xf32>, vector<16x32xf32>, vector<8x32xf32> -> vector<8x32xf32>
    %58 = vector.extract_strided_slice %34 {offsets = [0, 16], sizes = [8, 16], strides = [1, 1]} : vector<8x96xf32> to vector<8x16xf32>
    %59 = vector.extract_strided_slice %34 {offsets = [0, 48], sizes = [8, 16], strides = [1, 1]} : vector<8x96xf32> to vector<8x16xf32>
    %60 = vector.extract_strided_slice %34 {offsets = [0, 80], sizes = [8, 16], strides = [1, 1]} : vector<8x96xf32> to vector<8x16xf32>
    %cst_29 = arith.constant dense<0.000000e+00> : vector<8x8xf32>
    %61 = tpu.matmul %58, %59, %cst_29 {dimension_numbers = #tpu.dot_dimension_numbers<[1], [1], [0], [0], [0, 0, 1, 0], [], []>} : vector<8x16xf32>, vector<8x16xf32>, vector<8x8xf32> -> vector<8x8xf32>
    %cst_30 = arith.constant 2.500000e-01 : f32
    %62 = vector.broadcast %cst_30 : f32 to vector<8x8xf32>
    %63 = arith.mulf %61, %62 : vector<8x8xf32>
    %64 = vector.broadcast %3 : vector<1x8xf32> to vector<8x8xf32>
    %65 = arith.addf %63, %64 : vector<8x8xf32>
    %cst_31 = arith.constant dense<0xFF800000> : vector<8xf32>
    %66 = vector.multi_reduction <maximumf>, %65, %cst_31 [1] : vector<8x8xf32> to vector<8xf32>
    %67 = vector.shape_cast %66 : vector<8xf32> to vector<8x1xf32>
    %68 = vector.broadcast %67 : vector<8x1xf32> to vector<8x8xf32>
    %69 = arith.subf %65, %68 : vector<8x8xf32>
    %70 = math.exp %69 : vector<8x8xf32>
    %cst_32 = arith.constant dense<0.000000e+00> : vector<8xf32>
    %71 = vector.multi_reduction <add>, %70, %cst_32 [1] : vector<8x8xf32> to vector<8xf32>
    %72 = vector.shape_cast %71 : vector<8xf32> to vector<8x1xf32>
    %73 = tpu.reciprocal %72 {approx = true} : vector<8x1xf32> -> vector<8x1xf32>
    %74 = vector.broadcast %73 : vector<8x1xf32> to vector<8x8xf32>
    %75 = arith.mulf %70, %74 : vector<8x8xf32>
    %cst_33 = arith.constant dense<0.000000e+00> : vector<8x16xf32>
    %76 = tpu.matmul %75, %60, %cst_33 {dimension_numbers = #tpu.dot_dimension_numbers<[1], [0], [0], [1], [0, 0, 1, 1], [], []>} : vector<8x8xf32>, vector<8x16xf32>, vector<8x16xf32> -> vector<8x16xf32>
    %77 = vector.extract_strided_slice %36 {offsets = [16, 0], sizes = [16, 32], strides = [1, 1]} : vector<32x32xf32> to vector<16x32xf32>
    %cst_34 = arith.constant dense<0.000000e+00> : vector<8x32xf32>
    %78 = tpu.matmul %76, %77, %cst_34 {dimension_numbers = #tpu.dot_dimension_numbers<[1], [0], [0], [1], [0, 0, 1, 1], [], []>} : vector<8x16xf32>, vector<16x32xf32>, vector<8x32xf32> -> vector<8x32xf32>
    %79 = arith.addf %57, %78 : vector<8x32xf32>
    %c0_35 = arith.constant 0 : index
    %c0_36 = arith.constant 0 : index
    %c0_37 = arith.constant 0 : index
    %80 = vector.load %arg6[%c0_35, %c0_36, %c0_37] : memref<2x1x32xf32, #tpu.memory_space<vmem>>, vector<1x1x32xf32>
    %81 = vector.shape_cast %80 : vector<1x1x32xf32> to vector<1x32xf32>
    %82 = vector.broadcast %81 : vector<1x32xf32> to vector<8x32xf32>
    %83 = arith.addf %79, %82 : vector<8x32xf32>
    %84 = arith.addf %83, %27 : vector<8x32xf32>
    %c0_38 = arith.constant 0 : index
    %c0_39 = arith.constant 0 : index
    %c0_40 = arith.constant 0 : index
    %85 = vector.load %arg7[%c0_38, %c0_39, %c0_40] : memref<2x1x32xf32, #tpu.memory_space<vmem>>, vector<1x1x32xf32>
    %86 = vector.shape_cast %85 : vector<1x1x32xf32> to vector<1x32xf32>
    %c0_41 = arith.constant 0 : index
    %c0_42 = arith.constant 0 : index
    %c0_43 = arith.constant 0 : index
    %87 = vector.load %arg8[%c0_41, %c0_42, %c0_43] : memref<2x1x32xf32, #tpu.memory_space<vmem>>, vector<1x1x32xf32>
    %88 = vector.shape_cast %87 : vector<1x1x32xf32> to vector<1x32xf32>
    %cst_44 = arith.constant dense<0.000000e+00> : vector<8xf32>
    %89 = vector.multi_reduction <add>, %84, %cst_44 [1] : vector<8x32xf32> to vector<8xf32>
    %90 = vector.shape_cast %89 : vector<8xf32> to vector<8x1xf32>
    %cst_45 = arith.constant 3.200000e+01 : f32
    %91 = vector.broadcast %cst_45 : f32 to vector<8x1xf32>
    %92 = arith.divf %90, %91 : vector<8x1xf32>
    %93 = vector.broadcast %92 : vector<8x1xf32> to vector<8x32xf32>
    %94 = arith.subf %84, %93 : vector<8x32xf32>
    %95 = arith.mulf %94, %94 : vector<8x32xf32>
    %cst_46 = arith.constant dense<0.000000e+00> : vector<8xf32>
    %96 = vector.multi_reduction <add>, %95, %cst_46 [1] : vector<8x32xf32> to vector<8xf32>
    %97 = vector.shape_cast %96 : vector<8xf32> to vector<8x1xf32>
    %cst_47 = arith.constant 3.200000e+01 : f32
    %98 = vector.broadcast %cst_47 : f32 to vector<8x1xf32>
    %99 = arith.divf %97, %98 : vector<8x1xf32>
    %100 = vector.broadcast %92 : vector<8x1xf32> to vector<8x32xf32>
    %101 = arith.subf %84, %100 : vector<8x32xf32>
    %cst_48 = arith.constant 9.99999996E-13 : f32
    %102 = vector.broadcast %cst_48 : f32 to vector<8x1xf32>
    %103 = arith.addf %99, %102 : vector<8x1xf32>
    %104 = math.rsqrt %103 : vector<8x1xf32>
    %105 = vector.broadcast %104 : vector<8x1xf32> to vector<8x32xf32>
    %106 = arith.mulf %101, %105 : vector<8x32xf32>
    %107 = vector.broadcast %86 : vector<1x32xf32> to vector<8x32xf32>
    %108 = arith.mulf %106, %107 : vector<8x32xf32>
    %109 = vector.broadcast %88 : vector<1x32xf32> to vector<8x32xf32>
    %110 = arith.addf %108, %109 : vector<8x32xf32>
    %c0_49 = arith.constant 0 : index
    %c0_50 = arith.constant 0 : index
    %c0_51 = arith.constant 0 : index
    %111 = vector.load %arg9[%c0_49, %c0_50, %c0_51] : memref<2x32x64xf32, #tpu.memory_space<vmem>>, vector<1x32x64xf32>
    %112 = vector.shape_cast %111 : vector<1x32x64xf32> to vector<32x64xf32>
    %cst_52 = arith.constant dense<0.000000e+00> : vector<8x64xf32>
    %113 = tpu.matmul %110, %112, %cst_52 {dimension_numbers = #tpu.dot_dimension_numbers<[1], [0], [0], [1], [0, 0, 1, 1], [], []>} : vector<8x32xf32>, vector<32x64xf32>, vector<8x64xf32> -> vector<8x64xf32>
    %c0_53 = arith.constant 0 : index
    %c0_54 = arith.constant 0 : index
    %c0_55 = arith.constant 0 : index
    %114 = vector.load %arg10[%c0_53, %c0_54, %c0_55] : memref<2x1x64xf32, #tpu.memory_space<vmem>>, vector<1x1x64xf32>
    %115 = vector.shape_cast %114 : vector<1x1x64xf32> to vector<1x64xf32>
    %116 = vector.broadcast %115 : vector<1x64xf32> to vector<8x64xf32>
    %117 = arith.addf %113, %116 : vector<8x64xf32>
    %cst_56 = arith.constant 5.000000e-01 : f32
    %118 = vector.broadcast %cst_56 : f32 to vector<8x64xf32>
    %119 = arith.mulf %118, %117 : vector<8x64xf32>
    %cst_57 = arith.constant 4.471500e-02 : f32
    %120 = vector.broadcast %cst_57 : f32 to vector<8x64xf32>
    %121 = arith.mulf %120, %117 : vector<8x64xf32>
    %122 = arith.mulf %121, %117 : vector<8x64xf32>
    %123 = arith.mulf %122, %117 : vector<8x64xf32>
    %124 = arith.addf %117, %123 : vector<8x64xf32>
    %cst_58 = arith.constant 0.797884583 : f32
    %125 = vector.broadcast %cst_58 : f32 to vector<8x64xf32>
    %126 = arith.mulf %125, %124 : vector<8x64xf32>
    %127 = math.tanh %126 : vector<8x64xf32>
    %cst_59 = arith.constant 1.000000e+00 : f32
    %128 = vector.broadcast %cst_59 : f32 to vector<8x64xf32>
    %129 = arith.addf %128, %127 : vector<8x64xf32>
    %130 = arith.mulf %119, %129 : vector<8x64xf32>
    %c0_60 = arith.constant 0 : index
    %c0_61 = arith.constant 0 : index
    %c0_62 = arith.constant 0 : index
    %131 = vector.load %arg11[%c0_60, %c0_61, %c0_62] : memref<2x64x32xf32, #tpu.memory_space<vmem>>, vector<1x64x32xf32>
    %132 = vector.shape_cast %131 : vector<1x64x32xf32> to vector<64x32xf32>
    %cst_63 = arith.constant dense<0.000000e+00> : vector<8x32xf32>
    %133 = tpu.matmul %130, %132, %cst_63 {dimension_numbers = #tpu.dot_dimension_numbers<[1], [0], [0], [1], [0, 0, 1, 1], [], []>} : vector<8x64xf32>, vector<64x32xf32>, vector<8x32xf32> -> vector<8x32xf32>
    %c0_64 = arith.constant 0 : index
    %c0_65 = arith.constant 0 : index
    %c0_66 = arith.constant 0 : index
    %134 = vector.load %arg12[%c0_64, %c0_65, %c0_66] : memref<2x1x32xf32, #tpu.memory_space<vmem>>, vector<1x1x32xf32>
    %135 = vector.shape_cast %134 : vector<1x1x32xf32> to vector<1x32xf32>
    %136 = vector.broadcast %135 : vector<1x32xf32> to vector<8x32xf32>
    %137 = arith.addf %133, %136 : vector<8x32xf32>
    %138 = arith.addf %137, %110 : vector<8x32xf32>
    %c0_67 = arith.constant 0 : index
    %c0_68 = arith.constant 0 : index
    %c0_69 = arith.constant 0 : index
    %139 = vector.load %arg13[%c0_67, %c0_68, %c0_69] : memref<2x1x32xf32, #tpu.memory_space<vmem>>, vector<1x1x32xf32>
    %140 = vector.shape_cast %139 : vector<1x1x32xf32> to vector<1x32xf32>
    %c0_70 = arith.constant 0 : index
    %c0_71 = arith.constant 0 : index
    %c0_72 = arith.constant 0 : index
    %141 = vector.load %arg14[%c0_70, %c0_71, %c0_72] : memref<2x1x32xf32, #tpu.memory_space<vmem>>, vector<1x1x32xf32>
    %142 = vector.shape_cast %141 : vector<1x1x32xf32> to vector<1x32xf32>
    %cst_73 = arith.constant dense<0.000000e+00> : vector<8xf32>
    %143 = vector.multi_reduction <add>, %138, %cst_73 [1] : vector<8x32xf32> to vector<8xf32>
    %144 = vector.shape_cast %143 : vector<8xf32> to vector<8x1xf32>
    %cst_74 = arith.constant 3.200000e+01 : f32
    %145 = vector.broadcast %cst_74 : f32 to vector<8x1xf32>
    %146 = arith.divf %144, %145 : vector<8x1xf32>
    %147 = vector.broadcast %146 : vector<8x1xf32> to vector<8x32xf32>
    %148 = arith.subf %138, %147 : vector<8x32xf32>
    %149 = arith.mulf %148, %148 : vector<8x32xf32>
    %cst_75 = arith.constant dense<0.000000e+00> : vector<8xf32>
    %150 = vector.multi_reduction <add>, %149, %cst_75 [1] : vector<8x32xf32> to vector<8xf32>
    %151 = vector.shape_cast %150 : vector<8xf32> to vector<8x1xf32>
    %cst_76 = arith.constant 3.200000e+01 : f32
    %152 = vector.broadcast %cst_76 : f32 to vector<8x1xf32>
    %153 = arith.divf %151, %152 : vector<8x1xf32>
    %154 = vector.broadcast %146 : vector<8x1xf32> to vector<8x32xf32>
    %155 = arith.subf %138, %154 : vector<8x32xf32>
    %cst_77 = arith.constant 9.99999996E-13 : f32
    %156 = vector.broadcast %cst_77 : f32 to vector<8x1xf32>
    %157 = arith.addf %153, %156 : vector<8x1xf32>
    %158 = math.rsqrt %157 : vector<8x1xf32>
    %159 = vector.broadcast %158 : vector<8x1xf32> to vector<8x32xf32>
    %160 = arith.mulf %155, %159 : vector<8x32xf32>
    %161 = vector.broadcast %140 : vector<1x32xf32> to vector<8x32xf32>
    %162 = arith.mulf %160, %161 : vector<8x32xf32>
    %163 = vector.broadcast %142 : vector<1x32xf32> to vector<8x32xf32>
    %164 = arith.addf %162, %163 : vector<8x32xf32>
    %c1 = arith.constant 1 : index
    %c0_78 = arith.constant 0 : index
    %c0_79 = arith.constant 0 : index
    %165 = vector.load %arg3[%c1, %c0_78, %c0_79] : memref<2x32x96xf32, #tpu.memory_space<vmem>>, vector<1x32x96xf32>
    %166 = vector.shape_cast %165 : vector<1x32x96xf32> to vector<32x96xf32>
    %cst_80 = arith.constant dense<0.000000e+00> : vector<8x96xf32>
    %167 = tpu.matmul %164, %166, %cst_80 {dimension_numbers = #tpu.dot_dimension_numbers<[1], [0], [0], [1], [0, 0, 1, 1], [], []>} : vector<8x32xf32>, vector<32x96xf32>, vector<8x96xf32> -> vector<8x96xf32>
    %c1_81 = arith.constant 1 : index
    %c0_82 = arith.constant 0 : index
    %c0_83 = arith.constant 0 : index
    %168 = vector.load %arg4[%c1_81, %c0_82, %c0_83] : memref<2x1x96xf32, #tpu.memory_space<vmem>>, vector<1x1x96xf32>
    %169 = vector.shape_cast %168 : vector<1x1x96xf32> to vector<1x96xf32>
    %170 = vector.broadcast %169 : vector<1x96xf32> to vector<8x96xf32>
    %171 = arith.addf %167, %170 : vector<8x96xf32>
    %c1_84 = arith.constant 1 : index
    %c0_85 = arith.constant 0 : index
    %c0_86 = arith.constant 0 : index
    %172 = vector.load %arg5[%c1_84, %c0_85, %c0_86] : memref<2x32x32xf32, #tpu.memory_space<vmem>>, vector<1x32x32xf32>
    %173 = vector.shape_cast %172 : vector<1x32x32xf32> to vector<32x32xf32>
    %174 = vector.extract_strided_slice %171 {offsets = [0, 0], sizes = [8, 16], strides = [1, 1]} : vector<8x96xf32> to vector<8x16xf32>
    %175 = vector.extract_strided_slice %171 {offsets = [0, 32], sizes = [8, 16], strides = [1, 1]} : vector<8x96xf32> to vector<8x16xf32>
    %176 = vector.extract_strided_slice %171 {offsets = [0, 64], sizes = [8, 16], strides = [1, 1]} : vector<8x96xf32> to vector<8x16xf32>
    %cst_87 = arith.constant dense<0.000000e+00> : vector<8x8xf32>
    %177 = tpu.matmul %174, %175, %cst_87 {dimension_numbers = #tpu.dot_dimension_numbers<[1], [1], [0], [0], [0, 0, 1, 0], [], []>} : vector<8x16xf32>, vector<8x16xf32>, vector<8x8xf32> -> vector<8x8xf32>
    %cst_88 = arith.constant 2.500000e-01 : f32
    %178 = vector.broadcast %cst_88 : f32 to vector<8x8xf32>
    %179 = arith.mulf %177, %178 : vector<8x8xf32>
    %180 = vector.broadcast %3 : vector<1x8xf32> to vector<8x8xf32>
    %181 = arith.addf %179, %180 : vector<8x8xf32>
    %cst_89 = arith.constant dense<0xFF800000> : vector<8xf32>
    %182 = vector.multi_reduction <maximumf>, %181, %cst_89 [1] : vector<8x8xf32> to vector<8xf32>
    %183 = vector.shape_cast %182 : vector<8xf32> to vector<8x1xf32>
    %184 = vector.broadcast %183 : vector<8x1xf32> to vector<8x8xf32>
    %185 = arith.subf %181, %184 : vector<8x8xf32>
    %186 = math.exp %185 : vector<8x8xf32>
    %cst_90 = arith.constant dense<0.000000e+00> : vector<8xf32>
    %187 = vector.multi_reduction <add>, %186, %cst_90 [1] : vector<8x8xf32> to vector<8xf32>
    %188 = vector.shape_cast %187 : vector<8xf32> to vector<8x1xf32>
    %189 = tpu.reciprocal %188 {approx = true} : vector<8x1xf32> -> vector<8x1xf32>
    %190 = vector.broadcast %189 : vector<8x1xf32> to vector<8x8xf32>
    %191 = arith.mulf %186, %190 : vector<8x8xf32>
    %cst_91 = arith.constant dense<0.000000e+00> : vector<8x16xf32>
    %192 = tpu.matmul %191, %176, %cst_91 {dimension_numbers = #tpu.dot_dimension_numbers<[1], [0], [0], [1], [0, 0, 1, 1], [], []>} : vector<8x8xf32>, vector<8x16xf32>, vector<8x16xf32> -> vector<8x16xf32>
    %193 = vector.extract_strided_slice %173 {offsets = [0, 0], sizes = [16, 32], strides = [1, 1]} : vector<32x32xf32> to vector<16x32xf32>
    %cst_92 = arith.constant dense<0.000000e+00> : vector<8x32xf32>
    %194 = tpu.matmul %192, %193, %cst_92 {dimension_numbers = #tpu.dot_dimension_numbers<[1], [0], [0], [1], [0, 0, 1, 1], [], []>} : vector<8x16xf32>, vector<16x32xf32>, vector<8x32xf32> -> vector<8x32xf32>
    %195 = vector.extract_strided_slice %171 {offsets = [0, 16], sizes = [8, 16], strides = [1, 1]} : vector<8x96xf32> to vector<8x16xf32>
    %196 = vector.extract_strided_slice %171 {offsets = [0, 48], sizes = [8, 16], strides = [1, 1]} : vector<8x96xf32> to vector<8x16xf32>
    %197 = vector.extract_strided_slice %171 {offsets = [0, 80], sizes = [8, 16], strides = [1, 1]} : vector<8x96xf32> to vector<8x16xf32>
    %cst_93 = arith.constant dense<0.000000e+00> : vector<8x8xf32>
    %198 = tpu.matmul %195, %196, %cst_93 {dimension_numbers = #tpu.dot_dimension_numbers<[1], [1], [0], [0], [0, 0, 1, 0], [], []>} : vector<8x16xf32>, vector<8x16xf32>, vector<8x8xf32> -> vector<8x8xf32>
    %cst_94 = arith.constant 2.500000e-01 : f32
    %199 = vector.broadcast %cst_94 : f32 to vector<8x8xf32>
    %200 = arith.mulf %198, %199 : vector<8x8xf32>
    %201 = vector.broadcast %3 : vector<1x8xf32> to vector<8x8xf32>
    %202 = arith.addf %200, %201 : vector<8x8xf32>
    %cst_95 = arith.constant dense<0xFF800000> : vector<8xf32>
    %203 = vector.multi_reduction <maximumf>, %202, %cst_95 [1] : vector<8x8xf32> to vector<8xf32>
    %204 = vector.shape_cast %203 : vector<8xf32> to vector<8x1xf32>
    %205 = vector.broadcast %204 : vector<8x1xf32> to vector<8x8xf32>
    %206 = arith.subf %202, %205 : vector<8x8xf32>
    %207 = math.exp %206 : vector<8x8xf32>
    %cst_96 = arith.constant dense<0.000000e+00> : vector<8xf32>
    %208 = vector.multi_reduction <add>, %207, %cst_96 [1] : vector<8x8xf32> to vector<8xf32>
    %209 = vector.shape_cast %208 : vector<8xf32> to vector<8x1xf32>
    %210 = tpu.reciprocal %209 {approx = true} : vector<8x1xf32> -> vector<8x1xf32>
    %211 = vector.broadcast %210 : vector<8x1xf32> to vector<8x8xf32>
    %212 = arith.mulf %207, %211 : vector<8x8xf32>
    %cst_97 = arith.constant dense<0.000000e+00> : vector<8x16xf32>
    %213 = tpu.matmul %212, %197, %cst_97 {dimension_numbers = #tpu.dot_dimension_numbers<[1], [0], [0], [1], [0, 0, 1, 1], [], []>} : vector<8x8xf32>, vector<8x16xf32>, vector<8x16xf32> -> vector<8x16xf32>
    %214 = vector.extract_strided_slice %173 {offsets = [16, 0], sizes = [16, 32], strides = [1, 1]} : vector<32x32xf32> to vector<16x32xf32>
    %cst_98 = arith.constant dense<0.000000e+00> : vector<8x32xf32>
    %215 = tpu.matmul %213, %214, %cst_98 {dimension_numbers = #tpu.dot_dimension_numbers<[1], [0], [0], [1], [0, 0, 1, 1], [], []>} : vector<8x16xf32>, vector<16x32xf32>, vector<8x32xf32> -> vector<8x32xf32>
    %216 = arith.addf %194, %215 : vector<8x32xf32>
    %c1_99 = arith.constant 1 : index
    %c0_100 = arith.constant 0 : index
    %c0_101 = arith.constant 0 : index
    %217 = vector.load %arg6[%c1_99, %c0_100, %c0_101] : memref<2x1x32xf32, #tpu.memory_space<vmem>>, vector<1x1x32xf32>
    %218 = vector.shape_cast %217 : vector<1x1x32xf32> to vector<1x32xf32>
    %219 = vector.broadcast %218 : vector<1x32xf32> to vector<8x32xf32>
    %220 = arith.addf %216, %219 : vector<8x32xf32>
    %221 = arith.addf %220, %164 : vector<8x32xf32>
    %c1_102 = arith.constant 1 : index
    %c0_103 = arith.constant 0 : index
    %c0_104 = arith.constant 0 : index
    %222 = vector.load %arg7[%c1_102, %c0_103, %c0_104] : memref<2x1x32xf32, #tpu.memory_space<vmem>>, vector<1x1x32xf32>
    %223 = vector.shape_cast %222 : vector<1x1x32xf32> to vector<1x32xf32>
    %c1_105 = arith.constant 1 : index
    %c0_106 = arith.constant 0 : index
    %c0_107 = arith.constant 0 : index
    %224 = vector.load %arg8[%c1_105, %c0_106, %c0_107] : memref<2x1x32xf32, #tpu.memory_space<vmem>>, vector<1x1x32xf32>
    %225 = vector.shape_cast %224 : vector<1x1x32xf32> to vector<1x32xf32>
    %cst_108 = arith.constant dense<0.000000e+00> : vector<8xf32>
    %226 = vector.multi_reduction <add>, %221, %cst_108 [1] : vector<8x32xf32> to vector<8xf32>
    %227 = vector.shape_cast %226 : vector<8xf32> to vector<8x1xf32>
    %cst_109 = arith.constant 3.200000e+01 : f32
    %228 = vector.broadcast %cst_109 : f32 to vector<8x1xf32>
    %229 = arith.divf %227, %228 : vector<8x1xf32>
    %230 = vector.broadcast %229 : vector<8x1xf32> to vector<8x32xf32>
    %231 = arith.subf %221, %230 : vector<8x32xf32>
    %232 = arith.mulf %231, %231 : vector<8x32xf32>
    %cst_110 = arith.constant dense<0.000000e+00> : vector<8xf32>
    %233 = vector.multi_reduction <add>, %232, %cst_110 [1] : vector<8x32xf32> to vector<8xf32>
    %234 = vector.shape_cast %233 : vector<8xf32> to vector<8x1xf32>
    %cst_111 = arith.constant 3.200000e+01 : f32
    %235 = vector.broadcast %cst_111 : f32 to vector<8x1xf32>
    %236 = arith.divf %234, %235 : vector<8x1xf32>
    %237 = vector.broadcast %229 : vector<8x1xf32> to vector<8x32xf32>
    %238 = arith.subf %221, %237 : vector<8x32xf32>
    %cst_112 = arith.constant 9.99999996E-13 : f32
    %239 = vector.broadcast %cst_112 : f32 to vector<8x1xf32>
    %240 = arith.addf %236, %239 : vector<8x1xf32>
    %241 = math.rsqrt %240 : vector<8x1xf32>
    %242 = vector.broadcast %241 : vector<8x1xf32> to vector<8x32xf32>
    %243 = arith.mulf %238, %242 : vector<8x32xf32>
    %244 = vector.broadcast %223 : vector<1x32xf32> to vector<8x32xf32>
    %245 = arith.mulf %243, %244 : vector<8x32xf32>
    %246 = vector.broadcast %225 : vector<1x32xf32> to vector<8x32xf32>
    %247 = arith.addf %245, %246 : vector<8x32xf32>
    %c1_113 = arith.constant 1 : index
    %c0_114 = arith.constant 0 : index
    %c0_115 = arith.constant 0 : index
    %248 = vector.load %arg9[%c1_113, %c0_114, %c0_115] : memref<2x32x64xf32, #tpu.memory_space<vmem>>, vector<1x32x64xf32>
    %249 = vector.shape_cast %248 : vector<1x32x64xf32> to vector<32x64xf32>
    %cst_116 = arith.constant dense<0.000000e+00> : vector<8x64xf32>
    %250 = tpu.matmul %247, %249, %cst_116 {dimension_numbers = #tpu.dot_dimension_numbers<[1], [0], [0], [1], [0, 0, 1, 1], [], []>} : vector<8x32xf32>, vector<32x64xf32>, vector<8x64xf32> -> vector<8x64xf32>
    %c1_117 = arith.constant 1 : index
    %c0_118 = arith.constant 0 : index
    %c0_119 = arith.constant 0 : index
    %251 = vector.load %arg10[%c1_117, %c0_118, %c0_119] : memref<2x1x64xf32, #tpu.memory_space<vmem>>, vector<1x1x64xf32>
    %252 = vector.shape_cast %251 : vector<1x1x64xf32> to vector<1x64xf32>
    %253 = vector.broadcast %252 : vector<1x64xf32> to vector<8x64xf32>
    %254 = arith.addf %250, %253 : vector<8x64xf32>
    %cst_120 = arith.constant 5.000000e-01 : f32
    %255 = vector.broadcast %cst_120 : f32 to vector<8x64xf32>
    %256 = arith.mulf %255, %254 : vector<8x64xf32>
    %cst_121 = arith.constant 4.471500e-02 : f32
    %257 = vector.broadcast %cst_121 : f32 to vector<8x64xf32>
    %258 = arith.mulf %257, %254 : vector<8x64xf32>
    %259 = arith.mulf %258, %254 : vector<8x64xf32>
    %260 = arith.mulf %259, %254 : vector<8x64xf32>
    %261 = arith.addf %254, %260 : vector<8x64xf32>
    %cst_122 = arith.constant 0.797884583 : f32
    %262 = vector.broadcast %cst_122 : f32 to vector<8x64xf32>
    %263 = arith.mulf %262, %261 : vector<8x64xf32>
    %264 = math.tanh %263 : vector<8x64xf32>
    %cst_123 = arith.constant 1.000000e+00 : f32
    %265 = vector.broadcast %cst_123 : f32 to vector<8x64xf32>
    %266 = arith.addf %265, %264 : vector<8x64xf32>
    %267 = arith.mulf %256, %266 : vector<8x64xf32>
    %c1_124 = arith.constant 1 : index
    %c0_125 = arith.constant 0 : index
    %c0_126 = arith.constant 0 : index
    %268 = vector.load %arg11[%c1_124, %c0_125, %c0_126] : memref<2x64x32xf32, #tpu.memory_space<vmem>>, vector<1x64x32xf32>
    %269 = vector.shape_cast %268 : vector<1x64x32xf32> to vector<64x32xf32>
    %cst_127 = arith.constant dense<0.000000e+00> : vector<8x32xf32>
    %270 = tpu.matmul %267, %269, %cst_127 {dimension_numbers = #tpu.dot_dimension_numbers<[1], [0], [0], [1], [0, 0, 1, 1], [], []>} : vector<8x64xf32>, vector<64x32xf32>, vector<8x32xf32> -> vector<8x32xf32>
    %c1_128 = arith.constant 1 : index
    %c0_129 = arith.constant 0 : index
    %c0_130 = arith.constant 0 : index
    %271 = vector.load %arg12[%c1_128, %c0_129, %c0_130] : memref<2x1x32xf32, #tpu.memory_space<vmem>>, vector<1x1x32xf32>
    %272 = vector.shape_cast %271 : vector<1x1x32xf32> to vector<1x32xf32>
    %273 = vector.broadcast %272 : vector<1x32xf32> to vector<8x32xf32>
    %274 = arith.addf %270, %273 : vector<8x32xf32>
    %275 = arith.addf %274, %247 : vector<8x32xf32>
    %c1_131 = arith.constant 1 : index
    %c0_132 = arith.constant 0 : index
    %c0_133 = arith.constant 0 : index
    %276 = vector.load %arg13[%c1_131, %c0_132, %c0_133] : memref<2x1x32xf32, #tpu.memory_space<vmem>>, vector<1x1x32xf32>
    %277 = vector.shape_cast %276 : vector<1x1x32xf32> to vector<1x32xf32>
    %c1_134 = arith.constant 1 : index
    %c0_135 = arith.constant 0 : index
    %c0_136 = arith.constant 0 : index
    %278 = vector.load %arg14[%c1_134, %c0_135, %c0_136] : memref<2x1x32xf32, #tpu.memory_space<vmem>>, vector<1x1x32xf32>
    %279 = vector.shape_cast %278 : vector<1x1x32xf32> to vector<1x32xf32>
    %cst_137 = arith.constant dense<0.000000e+00> : vector<8xf32>
    %280 = vector.multi_reduction <add>, %275, %cst_137 [1] : vector<8x32xf32> to vector<8xf32>
    %281 = vector.shape_cast %280 : vector<8xf32> to vector<8x1xf32>
    %cst_138 = arith.constant 3.200000e+01 : f32
    %282 = vector.broadcast %cst_138 : f32 to vector<8x1xf32>
    %283 = arith.divf %281, %282 : vector<8x1xf32>
    %284 = vector.broadcast %283 : vector<8x1xf32> to vector<8x32xf32>
    %285 = arith.subf %275, %284 : vector<8x32xf32>
    %286 = arith.mulf %285, %285 : vector<8x32xf32>
    %cst_139 = arith.constant dense<0.000000e+00> : vector<8xf32>
    %287 = vector.multi_reduction <add>, %286, %cst_139 [1] : vector<8x32xf32> to vector<8xf32>
    %288 = vector.shape_cast %287 : vector<8xf32> to vector<8x1xf32>
    %cst_140 = arith.constant 3.200000e+01 : f32
    %289 = vector.broadcast %cst_140 : f32 to vector<8x1xf32>
    %290 = arith.divf %288, %289 : vector<8x1xf32>
    %291 = vector.broadcast %283 : vector<8x1xf32> to vector<8x32xf32>
    %292 = arith.subf %275, %291 : vector<8x32xf32>
    %cst_141 = arith.constant 9.99999996E-13 : f32
    %293 = vector.broadcast %cst_141 : f32 to vector<8x1xf32>
    %294 = arith.addf %290, %293 : vector<8x1xf32>
    %295 = math.rsqrt %294 : vector<8x1xf32>
    %296 = vector.broadcast %295 : vector<8x1xf32> to vector<8x32xf32>
    %297 = arith.mulf %292, %296 : vector<8x32xf32>
    %298 = vector.broadcast %277 : vector<1x32xf32> to vector<8x32xf32>
    %299 = arith.mulf %297, %298 : vector<8x32xf32>
    %300 = vector.broadcast %279 : vector<1x32xf32> to vector<8x32xf32>
    %301 = arith.addf %299, %300 : vector<8x32xf32>
    %c0_142 = arith.constant 0 : index
    %c0_143 = arith.constant 0 : index
    %c0_144 = arith.constant 0 : index
    %302 = vector.load %arg17[%c0_142, %c0_143, %c0_144] : memref<1x8x32xf32, #tpu.memory_space<vmem>>, vector<1x8x32xf32>
    %303 = vector.shape_cast %302 : vector<1x8x32xf32> to vector<8x32xf32>
    %304 = vector.shape_cast %301 : vector<8x32xf32> to vector<1x8x32xf32>
    tpu.vector_store %arg17[%c0_142, %c0_143, %c0_144], %304 {strides = array<i32>} : memref<1x8x32xf32, #tpu.memory_space<vmem>>, vector<1x8x32xf32>,
    return
  }
  func.func @transform_0(%arg0: i32) -> (i32, i32, i32) {
    %c0_i32 = arith.constant 0 : i32
    %c0_i32_0 = arith.constant 0 : i32
    %c0_i32_1 = arith.constant 0 : i32
    return %arg0, %c0_i32, %c0_i32_0 : i32, i32, i32
  }
  func.func @transform_1(%arg0: i32) -> (i32, i32, i32) {
    %c0_i32 = arith.constant 0 : i32
    %c0_i32_0 = arith.constant 0 : i32
    %c0_i32_1 = arith.constant 0 : i32
    return %arg0, %c0_i32, %c0_i32_0 : i32, i32, i32
  }
  func.func @transform_2(%arg0: i32) -> (i32, i32, i32) {
    %c0_i32 = arith.constant 0 : i32
    %c0_i32_0 = arith.constant 0 : i32
    %c0_i32_1 = arith.constant 0 : i32
    %c0_i32_2 = arith.constant 0 : i32
    return %c0_i32, %c0_i32_0, %c0_i32_1 : i32, i32, i32
  }
  func.func @transform_3(%arg0: i32) -> (i32, i32, i32) {
    %c0_i32 = arith.constant 0 : i32
    %c0_i32_0 = arith.constant 0 : i32
    %c0_i32_1 = arith.constant 0 : i32
    %c0_i32_2 = arith.constant 0 : i32
    return %c0_i32, %c0_i32_0, %c0_i32_1 : i32, i32, i32
  }
  func.func @transform_4(%arg0: i32) -> (i32, i32, i32) {
    %c0_i32 = arith.constant 0 : i32
    %c0_i32_0 = arith.constant 0 : i32
    %c0_i32_1 = arith.constant 0 : i32
    %c0_i32_2 = arith.constant 0 : i32
    return %c0_i32, %c0_i32_0, %c0_i32_1 : i32, i32, i32
  }
  func.func @transform_5(%arg0: i32) -> (i32, i32, i32) {
    %c0_i32 = arith.constant 0 : i32
    %c0_i32_0 = arith.constant 0 : i32
    %c0_i32_1 = arith.constant 0 : i32
    %c0_i32_2 = arith.constant 0 : i32
    return %c0_i32, %c0_i32_0, %c0_i32_1 : i32, i32, i32
  }
  func.func @transform_6(%arg0: i32) -> (i32, i32, i32) {
    %c0_i32 = arith.constant 0 : i32
    %c0_i32_0 = arith.constant 0 : i32
    %c0_i32_1 = arith.constant 0 : i32
    %c0_i32_2 = arith.constant 0 : i32
    return %c0_i32, %c0_i32_0, %c0_i32_1 : i32, i32, i32
  }
  func.func @transform_7(%arg0: i32) -> (i32, i32, i32) {
    %c0_i32 = arith.constant 0 : i32
    %c0_i32_0 = arith.constant 0 : i32
    %c0_i32_1 = arith.constant 0 : i32
    %c0_i32_2 = arith.constant 0 : i32
    return %c0_i32, %c0_i32_0, %c0_i32_1 : i32, i32, i32
  }
  func.func @transform_8(%arg0: i32) -> (i32, i32, i32) {
    %c0_i32 = arith.constant 0 : i32
    %c0_i32_0 = arith.constant 0 : i32
    %c0_i32_1 = arith.constant 0 : i32
    %c0_i32_2 = arith.constant 0 : i32
    return %c0_i32, %c0_i32_0, %c0_i32_1 : i32, i32, i32
  }
  func.func @transform_9(%arg0: i32) -> (i32, i32, i32) {
    %c0_i32 = arith.constant 0 : i32
    %c0_i32_0 = arith.constant 0 : i32
    %c0_i32_1 = arith.constant 0 : i32
    %c0_i32_2 = arith.constant 0 : i32
    return %c0_i32, %c0_i32_0, %c0_i32_1 : i32, i32, i32
  }
  func.func @transform_10(%arg0: i32) -> (i32, i32, i32) {
    %c0_i32 = arith.constant 0 : i32
    %c0_i32_0 = arith.constant 0 : i32
    %c0_i32_1 = arith.constant 0 : i32
    %c0_i32_2 = arith.constant 0 : i32
    return %c0_i32, %c0_i32_0, %c0_i32_1 : i32, i32, i32
  }
  func.func @transform_11(%arg0: i32) -> (i32, i32, i32) {
    %c0_i32 = arith.constant 0 : i32
    %c0_i32_0 = arith.constant 0 : i32
    %c0_i32_1 = arith.constant 0 : i32
    %c0_i32_2 = arith.constant 0 : i32
    return %c0_i32, %c0_i32_0, %c0_i32_1 : i32, i32, i32
  }
  func.func @transform_12(%arg0: i32) -> (i32, i32, i32) {
    %c0_i32 = arith.constant 0 : i32
    %c0_i32_0 = arith.constant 0 : i32
    %c0_i32_1 = arith.constant 0 : i32
    %c0_i32_2 = arith.constant 0 : i32
    return %c0_i32, %c0_i32_0, %c0_i32_1 : i32, i32, i32
  }
  func.func @transform_13(%arg0: i32) -> (i32, i32, i32) {
    %c0_i32 = arith.constant 0 : i32
    %c0_i32_0 = arith.constant 0 : i32
    %c0_i32_1 = arith.constant 0 : i32
    %c0_i32_2 = arith.constant 0 : i32
    return %c0_i32, %c0_i32_0, %c0_i32_1 : i32, i32, i32
  }
  func.func @transform_14(%arg0: i32) -> (i32, i32) {
    %c0_i32 = arith.constant 0 : i32
    %c0_i32_0 = arith.constant 0 : i32
    %c0_i32_1 = arith.constant 0 : i32
    return %c0_i32, %c0_i32_0 : i32, i32
  }
  func.func @transform_15(%arg0: i32) -> (i32, i32) {
    %c0_i32 = arith.constant 0 : i32
    %c0_i32_0 = arith.constant 0 : i32
    %c0_i32_1 = arith.constant 0 : i32
    return %c0_i32, %c0_i32_0 : i32, i32
  }
  func.func @transform_16(%arg0: i32) -> (i32, i32, i32) {
    %c0_i32 = arith.constant 0 : i32
    %c0_i32_0 = arith.constant 0 : i32
    %c0_i32_1 = arith.constant 0 : i32
    return %arg0, %c0_i32, %c0_i32_0 : i32, i32, i32
  }
}

</mosaic_0001>

<llo_original>
// kernel: _lambda_.1
$region0: #{_lambda_.1}
  #allocation0 [shape = 'u32[]', space=smem, size = 0x4, offset = 0x4, fixed_abs, tag = 'smem constant byte address 0x4 - core index']
  #allocation1 [shape = 'u32[144,128]{1,0:T(1,128)}', space=vmem, size = 0x12000, scoped, tag = 'internal scratch']
  %s0 = inlined_call_operand.vmem [shape: f32[2,8,32], index: 0, kind: input, shape index: {}]
  %s1 = inlined_call_operand.vmem [shape: f32[2,1,8], index: 1, kind: input, shape index: {}]
  %s2 = inlined_call_operand.vmem [shape: f32[2,32,96], index: 2, kind: input, shape index: {}]
  %s3 = inlined_call_operand.vmem [shape: f32[2,1,96], index: 3, kind: input, shape index: {}]
  %s4 = inlined_call_operand.vmem [shape: f32[2,32,32], index: 4, kind: input, shape index: {}]
  %s5 = inlined_call_operand.vmem [shape: f32[2,1,32], index: 5, kind: input, shape index: {}]
  %s6 = inlined_call_operand.vmem [shape: f32[2,1,32], index: 6, kind: input, shape index: {}]
  %s7 = inlined_call_operand.vmem [shape: f32[2,1,32], index: 7, kind: input, shape index: {}]
  %s8 = inlined_call_operand.vmem [shape: f32[2,32,64], index: 8, kind: input, shape index: {}]
  %s9 = inlined_call_operand.vmem [shape: f32[2,1,64], index: 9, kind: input, shape index: {}]
  %s10 = inlined_call_operand.vmem [shape: f32[2,64,32], index: 10, kind: input, shape index: {}]
  %s11 = inlined_call_operand.vmem [shape: f32[2,1,32], index: 11, kind: input, shape index: {}]
  %s12 = inlined_call_operand.vmem [shape: f32[2,1,32], index: 12, kind: input, shape index: {}]
  %s13 = inlined_call_operand.vmem [shape: f32[2,1,32], index: 13, kind: input, shape index: {}]
  %s14 = inlined_call_operand.vmem [shape: f32[1,32], index: 14, kind: input, shape index: {}]
  %s15 = inlined_call_operand.vmem [shape: f32[1,32], index: 15, kind: input, shape index: {}]
  %s16 = inlined_call_operand.vmem [shape: f32[2,8,32], index: 16, kind: output, shape index: {}]
  %s17 = sld [smem:[#allocation0]]
  $region97: #{_lambda_.1} parent=0
    _
  %s19 = ssub.s32 1, %s17
  %s20 = scalar_select 0, %s19, %s17
  loop: start=0, step=1, limit=4
  $region2: #{_lambda_.1} parent=0 // loop_pre_header
    _
  $region3: #{_lambda_.1} parent=0 // loop_header
    %s22 = sphi 0, %s26
    %p23 = scmp.ge.s32.totalorder %s22, 4
    %s32 = sphi 0, %s34
    %s35 = sphi 0, %s32
    %s36 = sphi 0, %s35
    %s52 = sphi 0, %s36
    %s58 = sphi 0, %s60
    %s61 = sphi 0, %s58
    %s62 = sphi 0, %s61
    %s78 = sphi 0, %s62
    %s82 = sphi 0, %s82
    %s84 = sphi 0, %s82
    %s85 = sphi 0, %s84
    %s99 = sphi 0, %s85
    %s103 = sphi 0, %s103
    %s105 = sphi 0, %s103
    %s106 = sphi 0, %s105
    %s120 = sphi 0, %s106
    %s124 = sphi 0, %s124
    %s126 = sphi 0, %s124
    %s127 = sphi 0, %s126
    %s141 = sphi 0, %s127
    %s145 = sphi 0, %s145
    %s147 = sphi 0, %s145
    %s148 = sphi 0, %s147
    %s162 = sphi 0, %s148
    %s166 = sphi 0, %s166
    %s168 = sphi 0, %s166
    %s169 = sphi 0, %s168
    %s183 = sphi 0, %s169
    %s187 = sphi 0, %s187
    %s189 = sphi 0, %s187
    %s190 = sphi 0, %s189
    %s204 = sphi 0, %s190
    %s208 = sphi 0, %s208
    %s210 = sphi 0, %s208
    %s211 = sphi 0, %s210
    %s225 = sphi 0, %s211
    %s229 = sphi 0, %s229
    %s231 = sphi 0, %s229
    %s232 = sphi 0, %s231
    %s246 = sphi 0, %s232
    %s250 = sphi 0, %s250
    %s252 = sphi 0, %s250
    %s253 = sphi 0, %s252
    %s267 = sphi 0, %s253
    %s271 = sphi 0, %s271
    %s273 = sphi 0, %s271
    %s274 = sphi 0, %s273
    %s288 = sphi 0, %s274
    %s292 = sphi 0, %s292
    %s294 = sphi 0, %s292
    %s295 = sphi 0, %s294
    %s309 = sphi 0, %s295
    %s313 = sphi 0, %s313
    %s315 = sphi 0, %s313
    %s316 = sphi 0, %s315
    %s330 = sphi 0, %s316
    %s334 = sphi 0, %s334
    %s336 = sphi 0, %s334
    %s337 = sphi 0, %s336
    %s351 = sphi 0, %s337
    %s355 = sphi 0, %s355
    %s357 = sphi 0, %s355
    %s358 = sphi 0, %s357
    %s372 = sphi 0, %s358
    %s378 = sphi 0, %s380
    %s381 = sphi 0, %s378
    %s382 = sphi 0, %s381
    %s398 = sphi 0, %s382
  $region4: #{_lambda_.1} parent=0 // loop_header_branch
    %25 = sbr.rel (%p23) target = $region8
  $region5: #{_lambda_.1} parent=0 // loop_body
    %s27 = ssub.s32 %s22, 1
    %s28 = ssub.s32 %s22, 2
    %s29 = sadd.s32 %s22, 1
    %s30 = ssub.s32 %s22, %s29
    %p31 = scmp.eq.s32.totalorder %s30, 0
    %s33 = sadd.s32 %s32, 1
    %s34 = scalar_select %p31, %s32, %s33
    %p37 = pneg %p31
    %p38 = scmp.eq.s32.totalorder %s22, 1
    %p39 = por %p37, %p38
    %p40 = scmp.ne.s32.totalorder %s32, %s35
    %p41 = scmp.eq.s32.totalorder %s22, 0
    %p42 = por %p40, %p41
    %p43 = scmp.ne.s32.totalorder %s32, %s35
    %p44 = scmp.eq.s32.totalorder %s27, 1
    %p45 = por %p43, %p44
    %p46 = scmp.ne.s32.totalorder %s35, %s36
    %p47 = scmp.eq.s32.totalorder %s27, 0
    %p48 = por %p46, %p47
    %p49 = scmp.ne.s32.totalorder %s35, %s36
    %p50 = scmp.eq.s32.totalorder %s28, 1
    %p51 = por %p49, %p50
    %p53 = scmp.ne.s32.totalorder %s36, %s52
    %p54 = scmp.eq.s32.totalorder %s28, 0
    %p55 = por %p53, %p54
    %s56 = ssub.s32 %s22, %s29
    %p57 = scmp.eq.s32.totalorder %s56, 0
    %s59 = sadd.s32 %s58, 1
    %s60 = scalar_select %p57, %s58, %s59
    %p63 = pneg %p57
    %p64 = scmp.eq.s32.totalorder %s22, 1
    %p65 = por %p63, %p64
    %p66 = scmp.ne.s32.totalorder %s58, %s61
    %p67 = scmp.eq.s32.totalorder %s22, 0
    %p68 = por %p66, %p67
    %p69 = scmp.ne.s32.totalorder %s58, %s61
    %p70 = scmp.eq.s32.totalorder %s27, 1
    %p71 = por %p69, %p70
    %p72 = scmp.ne.s32.totalorder %s61, %s62
    %p73 = scmp.eq.s32.totalorder %s27, 0
    %p74 = por %p72, %p73
    %p75 = scmp.ne.s32.totalorder %s61, %s62
    %p76 = scmp.eq.s32.totalorder %s28, 1
    %p77 = por %p75, %p76
    %p79 = scmp.ne.s32.totalorder %s62, %s78
    %p80 = scmp.eq.s32.totalorder %s28, 0
    %p81 = por %p79, %p80
    %s83 = sadd.s32 %s82, 1
    %p86 = scmp.eq.s32.totalorder %s22, 1
    %p87 = scmp.ne.s32.totalorder %s82, %s84
    %p88 = scmp.eq.s32.totalorder %s22, 0
    %p89 = por %p87, %p88
    %p90 = scmp.ne.s32.totalorder %s82, %s84
    %p91 = scmp.eq.s32.totalorder %s27, 1
    %p92 = por %p90, %p91
    %p93 = scmp.ne.s32.totalorder %s84, %s85
    %p94 = scmp.eq.s32.totalorder %s27, 0
    %p95 = por %p93, %p94
    %p96 = scmp.ne.s32.totalorder %s84, %s85
    %p97 = scmp.eq.s32.totalorder %s28, 1
    %p98 = por %p96, %p97
    %p100 = scmp.ne.s32.totalorder %s85, %s99
    %p101 = scmp.eq.s32.totalorder %s28, 0
    %p102 = por %p100, %p101
    %s104 = sadd.s32 %s103, 1
    %p107 = scmp.eq.s32.totalorder %s22, 1
    %p108 = scmp.ne.s32.totalorder %s103, %s105
    %p109 = scmp.eq.s32.totalorder %s22, 0
    %p110 = por %p108, %p109
    %p111 = scmp.ne.s32.totalorder %s103, %s105
    %p112 = scmp.eq.s32.totalorder %s27, 1
    %p113 = por %p111, %p112
    %p114 = scmp.ne.s32.totalorder %s105, %s106
    %p115 = scmp.eq.s32.totalorder %s27, 0
    %p116 = por %p114, %p115
    %p117 = scmp.ne.s32.totalorder %s105, %s106
    %p118 = scmp.eq.s32.totalorder %s28, 1
    %p119 = por %p117, %p118
    %p121 = scmp.ne.s32.totalorder %s106, %s120
    %p122 = scmp.eq.s32.totalorder %s28, 0
    %p123 = por %p121, %p122
    %s125 = sadd.s32 %s124, 1
    %p128 = scmp.eq.s32.totalorder %s22, 1
    %p129 = scmp.ne.s32.totalorder %s124, %s126
    %p130 = scmp.eq.s32.totalorder %s22, 0
    %p131 = por %p129, %p130
    %p132 = scmp.ne.s32.totalorder %s124, %s126
    %p133 = scmp.eq.s32.totalorder %s27, 1
    %p134 = por %p132, %p133
    %p135 = scmp.ne.s32.totalorder %s126, %s127
    %p136 = scmp.eq.s32.totalorder %s27, 0
    %p137 = por %p135, %p136
    %p138 = scmp.ne.s32.totalorder %s126, %s127
    %p139 = scmp.eq.s32.totalorder %s28, 1
    %p140 = por %p138, %p139
    %p142 = scmp.ne.s32.totalorder %s127, %s141
    %p143 = scmp.eq.s32.totalorder %s28, 0
    %p144 = por %p142, %p143
    %s146 = sadd.s32 %s145, 1
    %p149 = scmp.eq.s32.totalorder %s22, 1
    %p150 = scmp.ne.s32.totalorder %s145, %s147
    %p151 = scmp.eq.s32.totalorder %s22, 0
    %p152 = por %p150, %p151
    %p153 = scmp.ne.s32.totalorder %s145, %s147
    %p154 = scmp.eq.s32.totalorder %s27, 1
    %p155 = por %p153, %p154
    %p156 = scmp.ne.s32.totalorder %s147, %s148
    %p157 = scmp.eq.s32.totalorder %s27, 0
    %p158 = por %p156, %p157
    %p159 = scmp.ne.s32.totalorder %s147, %s148
    %p160 = scmp.eq.s32.totalorder %s28, 1
    %p161 = por %p159, %p160
    %p163 = scmp.ne.s32.totalorder %s148, %s162
    %p164 = scmp.eq.s32.totalorder %s28, 0
    %p165 = por %p163, %p164
    %s167 = sadd.s32 %s166, 1
    %p170 = scmp.eq.s32.totalorder %s22, 1
    %p171 = scmp.ne.s32.totalorder %s166, %s168
    %p172 = scmp.eq.s32.totalorder %s22, 0
    %p173 = por %p171, %p172
    %p174 = scmp.ne.s32.totalorder %s166, %s168
    %p175 = scmp.eq.s32.totalorder %s27, 1
    %p176 = por %p174, %p175
    %p177 = scmp.ne.s32.totalorder %s168, %s169
    %p178 = scmp.eq.s32.totalorder %s27, 0
    %p179 = por %p177, %p178
    %p180 = scmp.ne.s32.totalorder %s168, %s169
    %p181 = scmp.eq.s32.totalorder %s28, 1
    %p182 = por %p180, %p181
    %p184 = scmp.ne.s32.totalorder %s169, %s183
    %p185 = scmp.eq.s32.totalorder %s28, 0
    %p186 = por %p184, %p185
    %s188 = sadd.s32 %s187, 1
    %p191 = scmp.eq.s32.totalorder %s22, 1
    %p192 = scmp.ne.s32.totalorder %s187, %s189
    %p193 = scmp.eq.s32.totalorder %s22, 0
    %p194 = por %p192, %p193
    %p195 = scmp.ne.s32.totalorder %s187, %s189
    %p196 = scmp.eq.s32.totalorder %s27, 1
    %p197 = por %p195, %p196
    %p198 = scmp.ne.s32.totalorder %s189, %s190
    %p199 = scmp.eq.s32.totalorder %s27, 0
    %p200 = por %p198, %p199
    %p201 = scmp.ne.s32.totalorder %s189, %s190
    %p202 = scmp.eq.s32.totalorder %s28, 1
    %p203 = por %p201, %p202
    %p205 = scmp.ne.s32.totalorder %s190, %s204
    %p206 = scmp.eq.s32.totalorder %s28, 0
    %p207 = por %p205, %p206
    %s209 = sadd.s32 %s208, 1
    %p212 = scmp.eq.s32.totalorder %s22, 1
    %p213 = scmp.ne.s32.totalorder %s208, %s210
    %p214 = scmp.eq.s32.totalorder %s22, 0
    %p215 = por %p213, %p214
    %p216 = scmp.ne.s32.totalorder %s208, %s210
    %p217 = scmp.eq.s32.totalorder %s27, 1
    %p218 = por %p216, %p217
    %p219 = scmp.ne.s32.totalorder %s210, %s211
    %p220 = scmp.eq.s32.totalorder %s27, 0
    %p221 = por %p219, %p220
    %p222 = scmp.ne.s32.totalorder %s210, %s211
    %p223 = scmp.eq.s32.totalorder %s28, 1
    %p224 = por %p222, %p223
    %p226 = scmp.ne.s32.totalorder %s211, %s225
    %p227 = scmp.eq.s32.totalorder %s28, 0
    %p228 = por %p226, %p227
    %s230 = sadd.s32 %s229, 1
    %p233 = scmp.eq.s32.totalorder %s22, 1
    %p234 = scmp.ne.s32.totalorder %s229, %s231
    %p235 = scmp.eq.s32.totalorder %s22, 0
    %p236 = por %p234, %p235
    %p237 = scmp.ne.s32.totalorder %s229, %s231
    %p238 = scmp.eq.s32.totalorder %s27, 1
    %p239 = por %p237, %p238
    %p240 = scmp.ne.s32.totalorder %s231, %s232
    %p241 = scmp.eq.s32.totalorder %s27, 0
    %p242 = por %p240, %p241
    %p243 = scmp.ne.s32.totalorder %s231, %s232
    %p244 = scmp.eq.s32.totalorder %s28, 1
    %p245 = por %p243, %p244
    %p247 = scmp.ne.s32.totalorder %s232, %s246
    %p248 = scmp.eq.s32.totalorder %s28, 0
    %p249 = por %p247, %p248
    %s251 = sadd.s32 %s250, 1
    %p254 = scmp.eq.s32.totalorder %s22, 1
    %p255 = scmp.ne.s32.totalorder %s250, %s252
    %p256 = scmp.eq.s32.totalorder %s22, 0
    %p257 = por %p255, %p256
    %p258 = scmp.ne.s32.totalorder %s250, %s252
    %p259 = scmp.eq.s32.totalorder %s27, 1
    %p260 = por %p258, %p259
    %p261 = scmp.ne.s32.totalorder %s252, %s253
    %p262 = scmp.eq.s32.totalorder %s27, 0
    %p263 = por %p261, %p262
    %p264 = scmp.ne.s32.totalorder %s252, %s253
    %p265 = scmp.eq.s32.totalorder %s28, 1
    %p266 = por %p264, %p265
    %p268 = scmp.ne.s32.totalorder %s253, %s267
    %p269 = scmp.eq.s32.totalorder %s28, 0
    %p270 = por %p268, %p269
    %s272 = sadd.s32 %s271, 1
    %p275 = scmp.eq.s32.totalorder %s22, 1
    %p276 = scmp.ne.s32.totalorder %s271, %s273
    %p277 = scmp.eq.s32.totalorder %s22, 0
    %p278 = por %p276, %p277
    %p279 = scmp.ne.s32.totalorder %s271, %s273
    %p280 = scmp.eq.s32.totalorder %s27, 1
    %p281 = por %p279, %p280
    %p282 = scmp.ne.s32.totalorder %s273, %s274
    %p283 = scmp.eq.s32.totalorder %s27, 0
    %p284 = por %p282, %p283
    %p285 = scmp.ne.s32.totalorder %s273, %s274
    %p286 = scmp.eq.s32.totalorder %s28, 1
    %p287 = por %p285, %p286
    %p289 = scmp.ne.s32.totalorder %s274, %s288
    %p290 = scmp.eq.s32.totalorder %s28, 0
    %p291 = por %p289, %p290
    %s293 = sadd.s32 %s292, 1
    %p296 = scmp.eq.s32.totalorder %s22, 1
    %p297 = scmp.ne.s32.totalorder %s292, %s294
    %p298 = scmp.eq.s32.totalorder %s22, 0
    %p299 = por %p297, %p298
    %p300 = scmp.ne.s32.totalorder %s292, %s294
    %p301 = scmp.eq.s32.totalorder %s27, 1
    %p302 = por %p300, %p301
    %p303 = scmp.ne.s32.totalorder %s294, %s295
    %p304 = scmp.eq.s32.totalorder %s27, 0
    %p305 = por %p303, %p304
    %p306 = scmp.ne.s32.totalorder %s294, %s295
    %p307 = scmp.eq.s32.totalorder %s28, 1
    %p308 = por %p306, %p307
    %p310 = scmp.ne.s32.totalorder %s295, %s309
    %p311 = scmp.eq.s32.totalorder %s28, 0
    %p312 = por %p310, %p311
    %s314 = sadd.s32 %s313, 1
    %p317 = scmp.eq.s32.totalorder %s22, 1
    %p318 = scmp.ne.s32.totalorder %s313, %s315
    %p319 = scmp.eq.s32.totalorder %s22, 0
    %p320 = por %p318, %p319
    %p321 = scmp.ne.s32.totalorder %s313, %s315
    %p322 = scmp.eq.s32.totalorder %s27, 1
    %p323 = por %p321, %p322
    %p324 = scmp.ne.s32.totalorder %s315, %s316
    %p325 = scmp.eq.s32.totalorder %s27, 0
    %p326 = por %p324, %p325
    %p327 = scmp.ne.s32.totalorder %s315, %s316
    %p328 = scmp.eq.s32.totalorder %s28, 1
    %p329 = por %p327, %p328
    %p331 = scmp.ne.s32.totalorder %s316, %s330
    %p332 = scmp.eq.s32.totalorder %s28, 0
    %p333 = por %p331, %p332
    %s335 = sadd.s32 %s334, 1
    %p338 = scmp.eq.s32.totalorder %s22, 1
    %p339 = scmp.ne.s32.totalorder %s334, %s336
    %p340 = scmp.eq.s32.totalorder %s22, 0
    %p341 = por %p339, %p340
    %p342 = scmp.ne.s32.totalorder %s334, %s336
    %p343 = scmp.eq.s32.totalorder %s27, 1
    %p344 = por %p342, %p343
    %p345 = scmp.ne.s32.totalorder %s336, %s337
    %p346 = scmp.eq.s32.totalorder %s27, 0
    %p347 = por %p345, %p346
    %p348 = scmp.ne.s32.totalorder %s336, %s337
    %p349 = scmp.eq.s32.totalorder %s28, 1
    %p350 = por %p348, %p349
    %p352 = scmp.ne.s32.totalorder %s337, %s351
    %p353 = scmp.eq.s32.totalorder %s28, 0
    %p354 = por %p352, %p353
    %s356 = sadd.s32 %s355, 1
    %p359 = scmp.eq.s32.totalorder %s22, 1
    %p360 = scmp.ne.s32.totalorder %s355, %s357
    %p361 = scmp.eq.s32.totalorder %s22, 0
    %p362 = por %p360, %p361
    %p363 = scmp.ne.s32.totalorder %s355, %s357
    %p364 = scmp.eq.s32.totalorder %s27, 1
    %p365 = por %p363, %p364
    %p366 = scmp.ne.s32.totalorder %s357, %s358
    %p367 = scmp.eq.s32.totalorder %s27, 0
    %p368 = por %p366, %p367
    %p369 = scmp.ne.s32.totalorder %s357, %s358
    %p370 = scmp.eq.s32.totalorder %s28, 1
    %p371 = por %p369, %p370
    %p373 = scmp.ne.s32.totalorder %s358, %s372
    %p374 = scmp.eq.s32.totalorder %s28, 0
    %p375 = por %p373, %p374
    %s376 = ssub.s32 %s22, %s29
    %p377 = scmp.eq.s32.totalorder %s376, 0
    %s379 = sadd.s32 %s378, 1
    %s380 = scalar_select %p377, %s378, %s379
    %p383 = pneg %p377
    %p384 = scmp.eq.s32.totalorder %s22, 1
    %p385 = por %p383, %p384
    %p386 = scmp.ne.s32.totalorder %s378, %s381
    %p387 = scmp.eq.s32.totalorder %s22, 0
    %p388 = por %p386, %p387
    %p389 = scmp.ne.s32.totalorder %s378, %s381
    %p390 = scmp.eq.s32.totalorder %s27, 1
    %p391 = por %p389, %p390
    %p392 = scmp.ne.s32.totalorder %s381, %s382
    %p393 = scmp.eq.s32.totalorder %s27, 0
    %p394 = por %p392, %p393
    %p395 = scmp.ne.s32.totalorder %s381, %s382
    %p396 = scmp.eq.s32.totalorder %s28, 1
    %p397 = por %p395, %p396
    %p399 = scmp.ne.s32.totalorder %s382, %s398
    %p400 = scmp.eq.s32.totalorder %s28, 0
    %p401 = por %p399, %p400
    %p402 = scmp.le.s32.totalorder 1, %s22
    %p403 = scmp.lt.s32.totalorder %s22, 3
    %p404 = pnand %p402, %p403
    %p405 = pneg %p404
    // Predicated region
    $region9: #{_lambda_.1} parent=5 // pred_check
      _
    $region10: #{_lambda_.1} parent=5 // pred_check_branch
      %407 = sbr.rel (%p404) target = $region12
    $region11: #{_lambda_.1} parent=5 // pred_region
      %s408 = ssub.s32 %s22, 1
      // Predicated region
      $region13: #{_lambda_.1} parent=11 // pred_check
        %p409 = pneg %p95
      $region14: #{_lambda_.1} parent=11 // pred_check_branch
        %411 = sbr.rel (%p409) target = $region16
      $region15: #{_lambda_.1} parent=11 // pred_region
        _
      $region16: #{_lambda_.1} parent=11 // pred_fallthru
        _
      // Predicated region
      $region17: #{_lambda_.1} parent=11 // pred_check
        %p412 = pneg %p116
      $region18: #{_lambda_.1} parent=11 // pred_check_branch
        %414 = sbr.rel (%p412) target = $region20
      $region19: #{_lambda_.1} parent=11 // pred_region
        _
      $region20: #{_lambda_.1} parent=11 // pred_fallthru
        _
      // Predicated region
      $region21: #{_lambda_.1} parent=11 // pred_check
        %p415 = pneg %p137
      $region22: #{_lambda_.1} parent=11 // pred_check_branch
        %417 = sbr.rel (%p415) target = $region24
      $region23: #{_lambda_.1} parent=11 // pred_region
        _
      $region24: #{_lambda_.1} parent=11 // pred_fallthru
        _
      // Predicated region
      $region25: #{_lambda_.1} parent=11 // pred_check
        %p418 = pneg %p158
      $region26: #{_lambda_.1} parent=11 // pred_check_branch
        %420 = sbr.rel (%p418) target = $region28
      $region27: #{_lambda_.1} parent=11 // pred_region
        _
      $region28: #{_lambda_.1} parent=11 // pred_fallthru
        _
      // Predicated region
      $region29: #{_lambda_.1} parent=11 // pred_check
        %p421 = pneg %p179
      $region30: #{_lambda_.1} parent=11 // pred_check_branch
        %423 = sbr.rel (%p421) target = $region32
      $region31: #{_lambda_.1} parent=11 // pred_region
        _
      $region32: #{_lambda_.1} parent=11 // pred_fallthru
        _
      // Predicated region
      $region33: #{_lambda_.1} parent=11 // pred_check
        %p424 = pneg %p200
      $region34: #{_lambda_.1} parent=11 // pred_check_branch
        %426 = sbr.rel (%p424) target = $region36
      $region35: #{_lambda_.1} parent=11 // pred_region
        _
      $region36: #{_lambda_.1} parent=11 // pred_fallthru
        _
      // Predicated region
      $region37: #{_lambda_.1} parent=11 // pred_check
        %p427 = pneg %p221
      $region38: #{_lambda_.1} parent=11 // pred_check_branch
        %429 = sbr.rel (%p427) target = $region40
      $region39: #{_lambda_.1} parent=11 // pred_region
        _
      $region40: #{_lambda_.1} parent=11 // pred_fallthru
        _
      // Predicated region
      $region41: #{_lambda_.1} parent=11 // pred_check
        %p430 = pneg %p242
      $region42: #{_lambda_.1} parent=11 // pred_check_branch
        %432 = sbr.rel (%p430) target = $region44
      $region43: #{_lambda_.1} parent=11 // pred_region
        _
      $region44: #{_lambda_.1} parent=11 // pred_fallthru
        _
      // Predicated region
      $region45: #{_lambda_.1} parent=11 // pred_check
        %p433 = pneg %p263
      $region46: #{_lambda_.1} parent=11 // pred_check_branch
        %435 = sbr.rel (%p433) target = $region48
      $region47: #{_lambda_.1} parent=11 // pred_region
        _
      $region48: #{_lambda_.1} parent=11 // pred_fallthru
        _
      // Predicated region
      $region49: #{_lambda_.1} parent=11 // pred_check
        %p436 = pneg %p284
      $region50: #{_lambda_.1} parent=11 // pred_check_branch
        %438 = sbr.rel (%p436) target = $region52
      $region51: #{_lambda_.1} parent=11 // pred_region
        _
      $region52: #{_lambda_.1} parent=11 // pred_fallthru
        _
      // Predicated region
      $region53: #{_lambda_.1} parent=11 // pred_check
        %p439 = pneg %p305
      $region54: #{_lambda_.1} parent=11 // pred_check_branch
        %441 = sbr.rel (%p439) target = $region56
      $region55: #{_lambda_.1} parent=11 // pred_region
        _
      $region56: #{_lambda_.1} parent=11 // pred_fallthru
        _
      // Predicated region
      $region57: #{_lambda_.1} parent=11 // pred_check
        %p442 = pneg %p326
      $region58: #{_lambda_.1} parent=11 // pred_check_branch
        %444 = sbr.rel (%p442) target = $region60
      $region59: #{_lambda_.1} parent=11 // pred_region
        _
      $region60: #{_lambda_.1} parent=11 // pred_fallthru
        _
      // Predicated region
      $region61: #{_lambda_.1} parent=11 // pred_check
        %p445 = pneg %p347
      $region62: #{_lambda_.1} parent=11 // pred_check_branch
        %447 = sbr.rel (%p445) target = $region64
      $region63: #{_lambda_.1} parent=11 // pred_region
        _
      $region64: #{_lambda_.1} parent=11 // pred_fallthru
        _
      // Predicated region
      $region65: #{_lambda_.1} parent=11 // pred_check
        %p448 = pneg %p368
      $region66: #{_lambda_.1} parent=11 // pred_check_branch
        %450 = sbr.rel (%p448) target = $region68
      $region67: #{_lambda_.1} parent=11 // pred_region
        _
      $region68: #{_lambda_.1} parent=11 // pred_fallthru
        _
    $region12: #{_lambda_.1} parent=5 // pred_fallthru
      _
    %p451 = scmp.lt.s32.totalorder %s22, 2
    // Predicated region
    $region69: #{_lambda_.1} parent=5 // pred_check
      %p452 = pneg %p451
    $region70: #{_lambda_.1} parent=5 // pred_check_branch
      %454 = sbr.rel (%p452) target = $region72
    $region71: #{_lambda_.1} parent=5 // pred_region
      // Predicated region
      $region73: #{_lambda_.1} parent=71 // pred_check
        %p455 = pneg %p42
      $region74: #{_lambda_.1} parent=71 // pred_check_branch
        %457 = sbr.rel (%p455) target = $region76
      $region75: #{_lambda_.1} parent=71 // pred_region
        %p458 = scmp.lt.s32.totalorder %s22, 1
        %s459 = scalar_select %p458, %s22, 1
        %s460 = smul.addr %s459, 8
        %s461 = scalar_lea.vmem %s0, %s460
      $region76: #{_lambda_.1} parent=71 // pred_fallthru
        _
      // Predicated region
      $region77: #{_lambda_.1} parent=71 // pred_check
        %p462 = pneg %p68
      $region78: #{_lambda_.1} parent=71 // pred_check_branch
        %464 = sbr.rel (%p462) target = $region80
      $region79: #{_lambda_.1} parent=71 // pred_region
        %p465 = scmp.lt.s32.totalorder %s22, 1
        %s466 = scalar_select %p465, %s22, 1
        %s467 = scalar_lea.vmem %s1, %s466
      $region80: #{_lambda_.1} parent=71 // pred_fallthru
        _
    $region72: #{_lambda_.1} parent=5 // pred_fallthru
      _
    %p468 = scmp.le.s32.totalorder 1, %s22
    %p469 = scmp.lt.s32.totalorder %s22, 3
    %p470 = pnand %p468, %p469
    %p471 = pneg %p470
    // Predicated region
    $region81: #{_lambda_.1} parent=5 // pred_check
      _
    $region82: #{_lambda_.1} parent=5 // pred_check_branch
      %473 = sbr.rel (%p470) target = $region84
    $region83: #{_lambda_.1} parent=5 // pred_region
      %s474 = ssub.s32 %s22, 1
      %p475 = scmp.lt.s32.totalorder %s27, 1
      %s476 = scalar_select %p475, %s27, 1
      %s477 = smul.addr %s476, 8
      %s478 = scalar_lea.vmem %s0, %s477
      %p479 = pneg %p48
      %p480 = pneg %p45
      %p481 = scmp.lt.s32.totalorder %s27, 1
      %s482 = scalar_select %p481, %s27, 1
      %s483 = scalar_lea.vmem %s1, %s482
      %p484 = pneg %p74
      %p485 = pneg %p71
      %p486 = pneg %p95
      %p487 = pneg %p92
      %p488 = pneg %p116
      %p489 = pneg %p113
      %p490 = pneg %p137
      %p491 = pneg %p134
      %p492 = pneg %p158
      %p493 = pneg %p155
      %p494 = pneg %p179
      %p495 = pneg %p176
      %p496 = pneg %p200
      %p497 = pneg %p197
      %p498 = pneg %p221
      %p499 = pneg %p218
      %p500 = pneg %p242
      %p501 = pneg %p239
      %p502 = pneg %p263
      %p503 = pneg %p260
      %p504 = pneg %p284
      %p505 = pneg %p281
      %p506 = pneg %p305
      %p507 = pneg %p302
      %p508 = pneg %p326
      %p509 = pneg %p323
      %p510 = pneg %p347
      %p511 = pneg %p344
      %p512 = pneg %p368
      %p513 = pneg %p365
      %p514 = pneg %p394
      %p515 = pneg %p391
      %p516 = scmp.lt.s32.totalorder %s27, 1
      %s517 = scalar_select %p516, %s27, 1
      %s518 = smul.addr %s517, 8
      %s519 = scalar_lea.vmem %s16, %s518
      %p520 = scmp.lt.s32.totalorder %s27, 1
      %s521 = scalar_select %p520, %s27, 1
      %s522 = smul.addr %s521, 8
      %s523 = scalar_lea.vmem %s0, %s522
      %p524 = scmp.lt.s32.totalorder %s27, 1
      %s525 = scalar_select %p524, %s27, 1
      %s526 = scalar_lea.vmem %s1, %s525
      %p527 = scmp.lt.s32.totalorder %s27, 1
      %s528 = scalar_select %p527, %s27, 1
      %s529 = smul.addr %s528, 8
      %s530 = scalar_lea.vmem %s16, %s529
      %v531 = vld [vmem:[%s523] sm:$0xff]
      %v532 = vld [vmem:[%s526] sm:$0x1]
      %v533 = vld [vmem:[%s14] sm:$0x1]
      %v534 = vld [vmem:[%s15] sm:$0x1]
      %vm535 = vcmask 261120
      %v536 = vsel %vm535, %v531, 0.0
      %537 = vadd.xlane.f32.xlu0 %v536
      %v538 = vpop.xlane.xlu0 %537
      %v539 = vrcp.pop 32.0
      %v540 = vmul.f32 %v538, %v539
      %v541 = vsub.f32 %v531, %v540
      %v542 = vmul.f32 %v541, %v541
      %v543 = vsel %vm535, %v542, 0.0
      %544 = vadd.xlane.f32.xlu0 %v543
      %v545 = vpop.xlane.xlu0 %544
      %v546 = vmul.f32 %v545, %v539
      %v547 = vadd.f32 %v546, 1e-12
      %v548 = vrsqrt.pop %v547
      %v549 = vmul.f32 %v541, %v548
      %v551 = vlaneseq
      %v552 = vshrl.u32 %v551, 7
      %v553 = vsub.s32 0, %v552
      %v554 = vrot.slane %v533, %v553
      %v556 = vmul.f32 %v549, %v554
      %v558 = vlaneseq
      %v559 = vshrl.u32 %v558, 7
      %v560 = vsub.s32 0, %v559
      %v561 = vrot.slane %v534, %v560
      %v563 = vadd.f32 %v556, %v561
      %v564 = vld [vmem:[%s2] sm:$0xff]
      %v565 = vld [vmem:[%s2 + $0x8] sm:$0xff]
      %v566 = vld [vmem:[%s2 + $0x10] sm:$0xff]
      %v567 = vld [vmem:[%s2 + $0x18] sm:$0xff]
      %v568 = vld [vmem:[%s3] sm:$0x1]
      %v570 = vlaneseq
      %v571 = vshrl.u32 %v570, 7
      %v572 = vsub.s32 0, %v571
      %v573 = vrot.slane %v568, %v572
      %v576 = vsel %vm535, %v563, 0
      %578 = vmatprep.subr.mxu0 0.0
      %579 = vmatpush1.msra.mxu0 %v564
      %580 = vmatprep.subr.mxu0 0.0
      %581 = vmatpush1.msra.mxu0 %v565
      %582 = vmatprep.subr.mxu0 0.0
      %583 = vmatpush1.msra.mxu0 %v566
      %584 = vmatprep.subr.mxu0 0.0
      %585 = vmatpush1.msra.mxu0 %v567
      %586 = vmatprep.subr.mxu0 0.0
      %587 = vmatpush1.msra.mxu0 0.0
      %588 = vmatprep.subr.mxu0 0.0
      %589 = vmatpush1.msra.mxu0 0.0
      %590 = vmatprep.subr.mxu0 0.0
      %591 = vmatpush1.msra.mxu0 0.0
      %592 = vmatprep.subr.mxu0 0.0
      %593 = vmatpush1.msra.mxu0 0.0
      %594 = vmatprep.subr.mxu0 0.0
      %595 = vmatpush1.msra.mxu0 0.0
      %596 = vmatprep.subr.mxu0 0.0
      %597 = vmatpush1.msra.mxu0 0.0
      %598 = vmatprep.subr.mxu0 0.0
      %599 = vmatpush1.msra.mxu0 0.0
      %600 = vmatprep.subr.mxu0 0.0
      %601 = vmatpush1.msra.mxu0 0.0
      %602 = vmatprep.subr.mxu0 0.0
      %603 = vmatpush1.msra.mxu0 0.0
      %604 = vmatprep.subr.mxu0 0.0
      %605 = vmatpush1.msra.mxu0 0.0
      %606 = vmatprep.subr.mxu0 0.0
      %607 = vmatpush1.msra.mxu0 0.0
      %608 = vmatprep.subr.mxu0 0.0
      %609 = vmatpush1.msra.mxu0 0.0
      %610 = vmatprep.subr.mxu0 0.0
      %611 = vmatpush1.msra.mxu0 0.0
      %612 = vmatprep.subr.mxu0 0.0
      %613 = vmatpush1.msra.mxu0 0.0
      %614 = vmatprep.subr.mxu0 0.0
      %615 = vmatpush1.msra.mxu0 0.0
      %616 = vmatprep.subr.mxu0 0.0
      %617 = vmatpush1.msra.mxu0 0.0
      %618 = vmatprep.subr.mxu0 0.0
      %619 = vmatpush1.msra.mxu0 0.0
      %620 = vmatprep.subr.mxu0 0.0
      %621 = vmatpush1.msra.mxu0 0.0
      %622 = vmatprep.subr.mxu0 0.0
      %623 = vmatpush1.msra.mxu0 0.0
      %624 = vmatprep.subr.mxu0 0.0
      %625 = vmatpush1.msra.mxu0 0.0
      %626 = vmatprep.subr.mxu0 0.0
      %627 = vmatpush1.msra.mxu0 0.0
      %628 = vmatprep.subr.mxu0 0.0
      %629 = vmatpush1.msra.mxu0 0.0
      %630 = vmatprep.subr.mxu0 0.0
      %631 = vmatpush1.msra.mxu0 0.0
      %632 = vmatprep.subr.mxu0 0.0
      %633 = vmatpush1.msra.mxu0 0.0
      %634 = vmatprep.subr.mxu0 0.0
      %635 = vmatpush1.msra.mxu0 0.0
      %636 = vmatprep.subr.mxu0 0.0
      %637 = vmatpush1.msra.mxu0 0.0
      %638 = vmatprep.subr.mxu0 0.0
      %639 = vmatpush1.msra.mxu0 0.0
      %640 = vmatprep.subr.mxu0 0.0
      %641 = vmatpush1.msra.mxu0 0.0
      %642 = vmatprep.mubr.f32.mxu0 0.0
      %643 = vmatmul.mubr.f32.gmra.mrb[0].mxu0 %v576
      %v644 = vpop.f32.mrb[0].mxu0
      %v645 = vadd.f32 %v573, %v644
      %v646 = vpop.f32.mrb[0].mxu0
      %647 = vdwg.mxu0
      %v648 = vld [vmem:[%s4] sm:$0xff]
      %v649 = vld [vmem:[%s4 + $0x8] sm:$0xff]
      %v650 = vld [vmem:[%s4 + $0x10] sm:$0xff]
      %v651 = vld [vmem:[%s4 + $0x18] sm:$0xff]
      %653 = vrot.lane.b32.xlu0 %v645, 96
      %v654 = vpop.permute.xlu0 %653
      %vm655 = vcmask 130048
      %v656 = vsel %vm655, %v645, 0
      %v658 = vsel %vm655, %v654, 0
      %660 = vmatprep.subr.mxu0 0.0
      %661 = vmatpush1.xpose.msra.mxu0 %v658
      %662 = vmatprep.subr.mxu0 0.0
      %663 = vmatpush1.xpose.msra.mxu0 0.0
      %664 = vmatprep.subr.mxu0 0.0
      %665 = vmatpush1.xpose.msra.mxu0 0.0
      %666 = vmatprep.subr.mxu0 0.0
      %667 = vmatpush1.xpose.msra.mxu0 0.0
      %668 = vmatprep.subr.mxu0 0.0
      %669 = vmatpush1.xpose.msra.mxu0 0.0
      %670 = vmatprep.subr.mxu0 0.0
      %671 = vmatpush1.xpose.msra.mxu0 0.0
      %672 = vmatprep.subr.mxu0 0.0
      %673 = vmatpush1.xpose.msra.mxu0 0.0
      %674 = vmatprep.subr.mxu0 0.0
      %675 = vmatpush1.xpose.msra.mxu0 0.0
      %676 = vmatprep.subr.mxu0 0.0
      %677 = vmatpush1.xpose.msra.mxu0 0.0
      %678 = vmatprep.subr.mxu0 0.0
      %679 = vmatpush1.xpose.msra.mxu0 0.0
      %680 = vmatprep.subr.mxu0 0.0
      %681 = vmatpush1.xpose.msra.mxu0 0.0
      %682 = vmatprep.subr.mxu0 0.0
      %683 = vmatpush1.xpose.msra.mxu0 0.0
      %684 = vmatprep.subr.mxu0 0.0
      %685 = vmatpush1.xpose.msra.mxu0 0.0
      %686 = vmatprep.subr.mxu0 0.0
      %687 = vmatpush1.xpose.msra.mxu0 0.0
      %688 = vmatprep.subr.mxu0 0.0
      %689 = vmatpush1.xpose.msra.mxu0 0.0
      %690 = vmatprep.subr.mxu0 0.0
      %691 = vmatpush1.xpose.msra.mxu0 0.0
      %692 = vmatprep.subr.mxu0 0.0
      %693 = vmatpush1.xpose.msra.mxu0 0.0
      %694 = vmatprep.subr.mxu0 0.0
      %695 = vmatpush1.xpose.msra.mxu0 0.0
      %696 = vmatprep.subr.mxu0 0.0
      %697 = vmatpush1.xpose.msra.mxu0 0.0
      %698 = vmatprep.subr.mxu0 0.0
      %699 = vmatpush1.xpose.msra.mxu0 0.0
      %700 = vmatprep.subr.mxu0 0.0
      %701 = vmatpush1.xpose.msra.mxu0 0.0
      %702 = vmatprep.subr.mxu0 0.0
      %703 = vmatpush1.xpose.msra.mxu0 0.0
      %704 = vmatprep.subr.mxu0 0.0
      %705 = vmatpush1.xpose.msra.mxu0 0.0
      %706 = vmatprep.subr.mxu0 0.0
      %707 = vmatpush1.xpose.msra.mxu0 0.0
      %708 = vmatprep.subr.mxu0 0.0
      %709 = vmatpush1.xpose.msra.mxu0 0.0
      %710 = vmatprep.subr.mxu0 0.0
      %711 = vmatpush1.xpose.msra.mxu0 0.0
      %712 = vmatprep.subr.mxu0 0.0
      %713 = vmatpush1.xpose.msra.mxu0 0.0
      %714 = vmatprep.subr.mxu0 0.0
      %715 = vmatpush1.xpose.msra.mxu0 0.0
      %716 = vmatprep.subr.mxu0 0.0
      %717 = vmatpush1.xpose.msra.mxu0 0.0
      %718 = vmatprep.subr.mxu0 0.0
      %719 = vmatpush1.xpose.msra.mxu0 0.0
      %720 = vmatprep.subr.mxu0 0.0
      %721 = vmatpush1.xpose.msra.mxu0 0.0
      %722 = vmatprep.subr.mxu0 0.0
      %723 = vmatpush1.xpose.msra.mxu0 0.0
      %724 = vmatprep.mubr.f32.mxu0 0.0
      %725 = vmatmul.mubr.f32.gmra.mrb[0].mxu0 %v656
      %v726 = vpop.f32.mrb[0].mxu0
      %v727 = vadd.f32 0.0, %v726
      %v728 = vpop.f32.mrb[0].mxu0
      %729 = vdwg.mxu0
      %v730 = vmul.f32 %v727, 0.25
      %v732 = vlaneseq
      %v733 = vshrl.u32 %v732, 7
      %v734 = vsub.s32 0, %v733
      %v735 = vrot.slane %v532, %v734
      %v737 = vadd.f32 %v730, %v735
      %vm738 = vcmask 64512
      %v739 = vsel %vm738, %v737, -inf
      %740 = vmax.xlane.f32.xlu0 %v739
      %v741 = vpop.xlane.xlu0 %740
      %v742 = vsub.f32 %v737, %v741
      %v743 = vmul.f32 %v742, 1.442695
      %v744 = vpow.pop %v743
      %v745 = vsel %vm738, %v744, 0.0
      %746 = vadd.xlane.f32.xlu0 %v745
      %v747 = vpop.xlane.xlu0 %746
      %v748 = vrcp.pop %v747
      %v749 = vmul.f32 %v744, %v748
      %750 = vrot.lane.b32.xlu0 %v645, 64
      %v751 = vpop.permute.xlu0 %750
      %v754 = vsel %vm738, %v749, 0
      %756 = vmatprep.subr.mxu0 0.0
      %757 = vmatpush1.msra.mxu0 %v751
      %758 = vmatprep.subr.mxu0 0.0
      %759 = vmatpush1.msra.mxu0 0.0
      %760 = vmatprep.subr.mxu0 0.0
      %761 = vmatpush1.msra.mxu0 0.0
      %762 = vmatprep.subr.mxu0 0.0
      %763 = vmatpush1.msra.mxu0 0.0
      %764 = vmatprep.subr.mxu0 0.0
      %765 = vmatpush1.msra.mxu0 0.0
      %766 = vmatprep.subr.mxu0 0.0
      %767 = vmatpush1.msra.mxu0 0.0
      %768 = vmatprep.subr.mxu0 0.0
      %769 = vmatpush1.msra.mxu0 0.0
      %770 = vmatprep.subr.mxu0 0.0
      %771 = vmatpush1.msra.mxu0 0.0
      %772 = vmatprep.subr.mxu0 0.0
      %773 = vmatpush1.msra.mxu0 0.0
      %774 = vmatprep.subr.mxu0 0.0
      %775 = vmatpush1.msra.mxu0 0.0
      %776 = vmatprep.subr.mxu0 0.0
      %777 = vmatpush1.msra.mxu0 0.0
      %778 = vmatprep.subr.mxu0 0.0
      %779 = vmatpush1.msra.mxu0 0.0
      %780 = vmatprep.subr.mxu0 0.0
      %781 = vmatpush1.msra.mxu0 0.0
      %782 = vmatprep.subr.mxu0 0.0
      %783 = vmatpush1.msra.mxu0 0.0
      %784 = vmatprep.subr.mxu0 0.0
      %785 = vmatpush1.msra.mxu0 0.0
      %786 = vmatprep.subr.mxu0 0.0
      %787 = vmatpush1.msra.mxu0 0.0
      %788 = vmatprep.subr.mxu0 0.0
      %789 = vmatpush1.msra.mxu0 0.0
      %790 = vmatprep.subr.mxu0 0.0
      %791 = vmatpush1.msra.mxu0 0.0
      %792 = vmatprep.subr.mxu0 0.0
      %793 = vmatpush1.msra.mxu0 0.0
      %794 = vmatprep.subr.mxu0 0.0
      %795 = vmatpush1.msra.mxu0 0.0
      %796 = vmatprep.subr.mxu0 0.0
      %797 = vmatpush1.msra.mxu0 0.0
      %798 = vmatprep.subr.mxu0 0.0
      %799 = vmatpush1.msra.mxu0 0.0
      %800 = vmatprep.subr.mxu0 0.0
      %801 = vmatpush1.msra.mxu0 0.0
      %802 = vmatprep.subr.mxu0 0.0
      %803 = vmatpush1.msra.mxu0 0.0
      %804 = vmatprep.subr.mxu0 0.0
      %805 = vmatpush1.msra.mxu0 0.0
      %806 = vmatprep.subr.mxu0 0.0
      %807 = vmatpush1.msra.mxu0 0.0
      %808 = vmatprep.subr.mxu0 0.0
      %809 = vmatpush1.msra.mxu0 0.0
      %810 = vmatprep.subr.mxu0 0.0
      %811 = vmatpush1.msra.mxu0 0.0
      %812 = vmatprep.subr.mxu0 0.0
      %813 = vmatpush1.msra.mxu0 0.0
      %814 = vmatprep.subr.mxu0 0.0
      %815 = vmatpush1.msra.mxu0 0.0
      %816 = vmatprep.subr.mxu0 0.0
      %817 = vmatpush1.msra.mxu0 0.0
      %818 = vmatprep.subr.mxu0 0.0
      %819 = vmatpush1.msra.mxu0 0.0
      %820 = vmatprep.mubr.f32.mxu0 0.0
      %821 = vmatmul.mubr.f32.gmra.mrb[0].mxu0 %v754
      %v822 = vpop.f32.mrb[0].mxu0
      %v823 = vadd.f32 0.0, %v822
      %v824 = vpop.f32.mrb[0].mxu0
      %825 = vdwg.mxu0
      %826 = vrot.lane.b32.xlu0 %v645, 112
      %v827 = vpop.permute.xlu0 %826
      %828 = vrot.lane.b32.xlu0 %v645, 80
      %v829 = vpop.permute.xlu0 %828
      %v830 = vsel %vm655, %v827, 0
      %v832 = vsel %vm655, %v829, 0
      %834 = vmatprep.subr.mxu0 0.0
      %835 = vmatpush1.xpose.msra.mxu0 %v832
      %836 = vmatprep.subr.mxu0 0.0
      %837 = vmatpush1.xpose.msra.mxu0 0.0
      %838 = vmatprep.subr.mxu0 0.0
      %839 = vmatpush1.xpose.msra.mxu0 0.0
      %840 = vmatprep.subr.mxu0 0.0
      %841 = vmatpush1.xpose.msra.mxu0 0.0
      %842 = vmatprep.subr.mxu0 0.0
      %843 = vmatpush1.xpose.msra.mxu0 0.0
      %844 = vmatprep.subr.mxu0 0.0
      %845 = vmatpush1.xpose.msra.mxu0 0.0
      %846 = vmatprep.subr.mxu0 0.0
      %847 = vmatpush1.xpose.msra.mxu0 0.0
      %848 = vmatprep.subr.mxu0 0.0
      %849 = vmatpush1.xpose.msra.mxu0 0.0
      %850 = vmatprep.subr.mxu0 0.0
      %851 = vmatpush1.xpose.msra.mxu0 0.0
      %852 = vmatprep.subr.mxu0 0.0
      %853 = vmatpush1.xpose.msra.mxu0 0.0
      %854 = vmatprep.subr.mxu0 0.0
      %855 = vmatpush1.xpose.msra.mxu0 0.0
      %856 = vmatprep.subr.mxu0 0.0
      %857 = vmatpush1.xpose.msra.mxu0 0.0
      %858 = vmatprep.subr.mxu0 0.0
      %859 = vmatpush1.xpose.msra.mxu0 0.0
      %860 = vmatprep.subr.mxu0 0.0
      %861 = vmatpush1.xpose.msra.mxu0 0.0
      %862 = vmatprep.subr.mxu0 0.0
      %863 = vmatpush1.xpose.msra.mxu0 0.0
      %864 = vmatprep.subr.mxu0 0.0
      %865 = vmatpush1.xpose.msra.mxu0 0.0
      %866 = vmatprep.subr.mxu0 0.0
      %867 = vmatpush1.xpose.msra.mxu0 0.0
      %868 = vmatprep.subr.mxu0 0.0
      %869 = vmatpush1.xpose.msra.mxu0 0.0
      %870 = vmatprep.subr.mxu0 0.0
      %871 = vmatpush1.xpose.msra.mxu0 0.0
      %872 = vmatprep.subr.mxu0 0.0
      %873 = vmatpush1.xpose.msra.mxu0 0.0
      %874 = vmatprep.subr.mxu0 0.0
      %875 = vmatpush1.xpose.msra.mxu0 0.0
      %876 = vmatprep.subr.mxu0 0.0
      %877 = vmatpush1.xpose.msra.mxu0 0.0
      %878 = vmatprep.subr.mxu0 0.0
      %879 = vmatpush1.xpose.msra.mxu0 0.0
      %880 = vmatprep.subr.mxu0 0.0
      %881 = vmatpush1.xpose.msra.mxu0 0.0
      %882 = vmatprep.subr.mxu0 0.0
      %883 = vmatpush1.xpose.msra.mxu0 0.0
      %884 = vmatprep.subr.mxu0 0.0
      %885 = vmatpush1.xpose.msra.mxu0 0.0
      %886 = vmatprep.subr.mxu0 0.0
      %887 = vmatpush1.xpose.msra.mxu0 0.0
      %888 = vmatprep.subr.mxu0 0.0
      %889 = vmatpush1.xpose.msra.mxu0 0.0
      %890 = vmatprep.subr.mxu0 0.0
      %891 = vmatpush1.xpose.msra.mxu0 0.0
      %892 = vmatprep.subr.mxu0 0.0
      %893 = vmatpush1.xpose.msra.mxu0 0.0
      %894 = vmatprep.subr.mxu0 0.0
      %895 = vmatpush1.xpose.msra.mxu0 0.0
      %896 = vmatprep.subr.mxu0 0.0
      %897 = vmatpush1.xpose.msra.mxu0 0.0
      %898 = vmatprep.mubr.f32.mxu0 0.0
      %899 = vmatmul.mubr.f32.gmra.mrb[0].mxu0 %v830
      %v900 = vpop.f32.mrb[0].mxu0
      %v901 = vadd.f32 0.0, %v900
      %v902 = vpop.f32.mrb[0].mxu0
      %903 = vdwg.mxu0
      %v904 = vmul.f32 %v901, 0.25
      %v905 = vadd.f32 %v904, %v735
      %v906 = vsel %vm738, %v905, -inf
      %907 = vmax.xlane.f32.xlu0 %v906
      %v908 = vpop.xlane.xlu0 %907
      %v909 = vsub.f32 %v905, %v908
      %v910 = vmul.f32 %v909, 1.442695
      %v911 = vpow.pop %v910
      %v912 = vsel %vm738, %v911, 0.0
      %913 = vadd.xlane.f32.xlu0 %v912
      %v914 = vpop.xlane.xlu0 %913
      %v915 = vrcp.pop %v914
      %v916 = vmul.f32 %v911, %v915
      %917 = vrot.lane.b32.xlu0 %v645, 48
      %v918 = vpop.permute.xlu0 %917
      %v921 = vsel %vm738, %v916, 0
      %923 = vmatprep.subr.mxu0 0.0
      %924 = vmatpush1.msra.mxu0 %v918
      %925 = vmatprep.subr.mxu0 0.0
      %926 = vmatpush1.msra.mxu0 0.0
      %927 = vmatprep.subr.mxu0 0.0
      %928 = vmatpush1.msra.mxu0 0.0
      %929 = vmatprep.subr.mxu0 0.0
      %930 = vmatpush1.msra.mxu0 0.0
      %931 = vmatprep.subr.mxu0 0.0
      %932 = vmatpush1.msra.mxu0 0.0
      %933 = vmatprep.subr.mxu0 0.0
      %934 = vmatpush1.msra.mxu0 0.0
      %935 = vmatprep.subr.mxu0 0.0
      %936 = vmatpush1.msra.mxu0 0.0
      %937 = vmatprep.subr.mxu0 0.0
      %938 = vmatpush1.msra.mxu0 0.0
      %939 = vmatprep.subr.mxu0 0.0
      %940 = vmatpush1.msra.mxu0 0.0
      %941 = vmatprep.subr.mxu0 0.0
      %942 = vmatpush1.msra.mxu0 0.0
      %943 = vmatprep.subr.mxu0 0.0
      %944 = vmatpush1.msra.mxu0 0.0
      %945 = vmatprep.subr.mxu0 0.0
      %946 = vmatpush1.msra.mxu0 0.0
      %947 = vmatprep.subr.mxu0 0.0
      %948 = vmatpush1.msra.mxu0 0.0
      %949 = vmatprep.subr.mxu0 0.0
      %950 = vmatpush1.msra.mxu0 0.0
      %951 = vmatprep.subr.mxu0 0.0
      %952 = vmatpush1.msra.mxu0 0.0
      %953 = vmatprep.subr.mxu0 0.0
      %954 = vmatpush1.msra.mxu0 0.0
      %955 = vmatprep.subr.mxu0 0.0
      %956 = vmatpush1.msra.mxu0 0.0
      %957 = vmatprep.subr.mxu0 0.0
      %958 = vmatpush1.msra.mxu0 0.0
      %959 = vmatprep.subr.mxu0 0.0
      %960 = vmatpush1.msra.mxu0 0.0
      %961 = vmatprep.subr.mxu0 0.0
      %962 = vmatpush1.msra.mxu0 0.0
      %963 = vmatprep.subr.mxu0 0.0
      %964 = vmatpush1.msra.mxu0 0.0
      %965 = vmatprep.subr.mxu0 0.0
      %966 = vmatpush1.msra.mxu0 0.0
      %967 = vmatprep.subr.mxu0 0.0
      %968 = vmatpush1.msra.mxu0 0.0
      %969 = vmatprep.subr.mxu0 0.0
      %970 = vmatpush1.msra.mxu0 0.0
      %971 = vmatprep.subr.mxu0 0.0
      %972 = vmatpush1.msra.mxu0 0.0
      %973 = vmatprep.subr.mxu0 0.0
      %974 = vmatpush1.msra.mxu0 0.0
      %975 = vmatprep.subr.mxu0 0.0
      %976 = vmatpush1.msra.mxu0 0.0
      %977 = vmatprep.subr.mxu0 0.0
      %978 = vmatpush1.msra.mxu0 0.0
      %979 = vmatprep.subr.mxu0 0.0
      %980 = vmatpush1.msra.mxu0 0.0
      %981 = vmatprep.subr.mxu0 0.0
      %982 = vmatpush1.msra.mxu0 0.0
      %983 = vmatprep.subr.mxu0 0.0
      %984 = vmatpush1.msra.mxu0 0.0
      %985 = vmatprep.subr.mxu0 0.0
      %986 = vmatpush1.msra.mxu0 0.0
      %987 = vmatprep.mubr.f32.mxu0 0.0
      %988 = vmatmul.mubr.f32.gmra.mrb[0].mxu0 %v921
      %v989 = vpop.f32.mrb[0].mxu0
      %v990 = vadd.f32 0.0, %v989
      %v991 = vpop.f32.mrb[0].mxu0
      %992 = vdwg.mxu0
      %v994 = vsel %vm655, %v990, 0
      %996 = vmatprep.subr.mxu0 0.0
      %997 = vmatpush1.msra.mxu0 %v650
      %998 = vmatprep.subr.mxu0 0.0
      %999 = vmatpush1.msra.mxu0 %v651
      %1000 = vmatprep.subr.mxu0 0.0
      %1001 = vmatpush1.msra.mxu0 0.0
      %1002 = vmatprep.subr.mxu0 0.0
      %1003 = vmatpush1.msra.mxu0 0.0
      %1004 = vmatprep.subr.mxu0 0.0
      %1005 = vmatpush1.msra.mxu0 0.0
      %1006 = vmatprep.subr.mxu0 0.0
      %1007 = vmatpush1.msra.mxu0 0.0
      %1008 = vmatprep.subr.mxu0 0.0
      %1009 = vmatpush1.msra.mxu0 0.0
      %1010 = vmatprep.subr.mxu0 0.0
      %1011 = vmatpush1.msra.mxu0 0.0
      %1012 = vmatprep.subr.mxu0 0.0
      %1013 = vmatpush1.msra.mxu0 0.0
      %1014 = vmatprep.subr.mxu0 0.0
      %1015 = vmatpush1.msra.mxu0 0.0
      %1016 = vmatprep.subr.mxu0 0.0
      %1017 = vmatpush1.msra.mxu0 0.0
      %1018 = vmatprep.subr.mxu0 0.0
      %1019 = vmatpush1.msra.mxu0 0.0
      %1020 = vmatprep.subr.mxu0 0.0
      %1021 = vmatpush1.msra.mxu0 0.0
      %1022 = vmatprep.subr.mxu0 0.0
      %1023 = vmatpush1.msra.mxu0 0.0
      %1024 = vmatprep.subr.mxu0 0.0
      %1025 = vmatpush1.msra.mxu0 0.0
      %1026 = vmatprep.subr.mxu0 0.0
      %1027 = vmatpush1.msra.mxu0 0.0
      %1028 = vmatprep.subr.mxu0 0.0
      %1029 = vmatpush1.msra.mxu0 0.0
      %1030 = vmatprep.subr.mxu0 0.0
      %1031 = vmatpush1.msra.mxu0 0.0
      %1032 = vmatprep.subr.mxu0 0.0
      %1033 = vmatpush1.msra.mxu0 0.0
      %1034 = vmatprep.subr.mxu0 0.0
      %1035 = vmatpush1.msra.mxu0 0.0
      %1036 = vmatprep.subr.mxu0 0.0
      %1037 = vmatpush1.msra.mxu0 0.0
      %1038 = vmatprep.subr.mxu0 0.0
      %1039 = vmatpush1.msra.mxu0 0.0
      %1040 = vmatprep.subr.mxu0 0.0
      %1041 = vmatpush1.msra.mxu0 0.0
      %1042 = vmatprep.subr.mxu0 0.0
      %1043 = vmatpush1.msra.mxu0 0.0
      %1044 = vmatprep.subr.mxu0 0.0
      %1045 = vmatpush1.msra.mxu0 0.0
      %1046 = vmatprep.subr.mxu0 0.0
      %1047 = vmatpush1.msra.mxu0 0.0
      %1048 = vmatprep.subr.mxu0 0.0
      %1049 = vmatpush1.msra.mxu0 0.0
      %1050 = vmatprep.subr.mxu0 0.0
      %1051 = vmatpush1.msra.mxu0 0.0
      %1052 = vmatprep.subr.mxu0 0.0
      %1053 = vmatpush1.msra.mxu0 0.0
      %1054 = vmatprep.subr.mxu0 0.0
      %1055 = vmatpush1.msra.mxu0 0.0
      %1056 = vmatprep.subr.mxu0 0.0
      %1057 = vmatpush1.msra.mxu0 0.0
      %1058 = vmatprep.subr.mxu0 0.0
      %1059 = vmatpush1.msra.mxu0 0.0
      %1060 = vmatprep.mubr.f32.mxu0 0.0
      %1061 = vmatmul.mubr.f32.gmra.mrb[0].mxu0 %v994
      %v1062 = vpop.f32.mrb[0].mxu0
      %v1063 = vadd.f32 0.0, %v1062
      %v1064 = vpop.f32.mrb[0].mxu0
      %1065 = vdwg.mxu0
      %v1067 = vsel %vm655, %v823, 0
      %1069 = vmatprep.subr.mxu0 0.0
      %1070 = vmatpush1.msra.mxu0 %v648
      %1071 = vmatprep.subr.mxu0 0.0
      %1072 = vmatpush1.msra.mxu0 %v649
      %1073 = vmatprep.subr.mxu0 0.0
      %1074 = vmatpush1.msra.mxu0 0.0
      %1075 = vmatprep.subr.mxu0 0.0
      %1076 = vmatpush1.msra.mxu0 0.0
      %1077 = vmatprep.subr.mxu0 0.0
      %1078 = vmatpush1.msra.mxu0 0.0
      %1079 = vmatprep.subr.mxu0 0.0
      %1080 = vmatpush1.msra.mxu0 0.0
      %1081 = vmatprep.subr.mxu0 0.0
      %1082 = vmatpush1.msra.mxu0 0.0
      %1083 = vmatprep.subr.mxu0 0.0
      %1084 = vmatpush1.msra.mxu0 0.0
      %1085 = vmatprep.subr.mxu0 0.0
      %1086 = vmatpush1.msra.mxu0 0.0
      %1087 = vmatprep.subr.mxu0 0.0
      %1088 = vmatpush1.msra.mxu0 0.0
      %1089 = vmatprep.subr.mxu0 0.0
      %1090 = vmatpush1.msra.mxu0 0.0
      %1091 = vmatprep.subr.mxu0 0.0
      %1092 = vmatpush1.msra.mxu0 0.0
      %1093 = vmatprep.subr.mxu0 0.0
      %1094 = vmatpush1.msra.mxu0 0.0
      %1095 = vmatprep.subr.mxu0 0.0
      %1096 = vmatpush1.msra.mxu0 0.0
      %1097 = vmatprep.subr.mxu0 0.0
      %1098 = vmatpush1.msra.mxu0 0.0
      %1099 = vmatprep.subr.mxu0 0.0
      %1100 = vmatpush1.msra.mxu0 0.0
      %1101 = vmatprep.subr.mxu0 0.0
      %1102 = vmatpush1.msra.mxu0 0.0
      %1103 = vmatprep.subr.mxu0 0.0
      %1104 = vmatpush1.msra.mxu0 0.0
      %1105 = vmatprep.subr.mxu0 0.0
      %1106 = vmatpush1.msra.mxu0 0.0
      %1107 = vmatprep.subr.mxu0 0.0
      %1108 = vmatpush1.msra.mxu0 0.0
      %1109 = vmatprep.subr.mxu0 0.0
      %1110 = vmatpush1.msra.mxu0 0.0
      %1111 = vmatprep.subr.mxu0 0.0
      %1112 = vmatpush1.msra.mxu0 0.0
      %1113 = vmatprep.subr.mxu0 0.0
      %1114 = vmatpush1.msra.mxu0 0.0
      %1115 = vmatprep.subr.mxu0 0.0
      %1116 = vmatpush1.msra.mxu0 0.0
      %1117 = vmatprep.subr.mxu0 0.0
      %1118 = vmatpush1.msra.mxu0 0.0
      %1119 = vmatprep.subr.mxu0 0.0
      %1120 = vmatpush1.msra.mxu0 0.0
      %1121 = vmatprep.subr.mxu0 0.0
      %1122 = vmatpush1.msra.mxu0 0.0
      %1123 = vmatprep.subr.mxu0 0.0
      %1124 = vmatpush1.msra.mxu0 0.0
      %1125 = vmatprep.subr.mxu0 0.0
      %1126 = vmatpush1.msra.mxu0 0.0
      %1127 = vmatprep.subr.mxu0 0.0
      %1128 = vmatpush1.msra.mxu0 0.0
      %1129 = vmatprep.subr.mxu0 0.0
      %1130 = vmatpush1.msra.mxu0 0.0
      %1131 = vmatprep.subr.mxu0 0.0
      %1132 = vmatpush1.msra.mxu0 0.0
      %1133 = vmatprep.mubr.f32.mxu0 0.0
      %1134 = vmatmul.mubr.f32.gmra.mrb[0].mxu0 %v1067
      %v1135 = vpop.f32.mrb[0].mxu0
      %v1136 = vadd.f32 %v1063, %v1135
      %v1137 = vpop.f32.mrb[0].mxu0
      %1138 = vdwg.mxu0
      %v1139 = vld [vmem:[%s5] sm:$0x1]
      %v1141 = vlaneseq
      %v1142 = vshrl.u32 %v1141, 7
      %v1143 = vsub.s32 0, %v1142
      %v1144 = vrot.slane %v1139, %v1143
      %v1146 = vadd.f32 %v1136, %v1144
      %v1147 = vadd.f32 %v1146, %v563
      %v1148 = vld [vmem:[%s6] sm:$0x1]
      %v1149 = vld [vmem:[%s7] sm:$0x1]
      %v1150 = vsel %vm535, %v1147, 0.0
      %1151 = vadd.xlane.f32.xlu0 %v1150
      %v1152 = vpop.xlane.xlu0 %1151
      %v1153 = vmul.f32 %v1152, %v539
      %v1154 = vsub.f32 %v1147, %v1153
      %v1155 = vmul.f32 %v1154, %v1154
      %v1156 = vsel %vm535, %v1155, 0.0
      %1157 = vadd.xlane.f32.xlu0 %v1156
      %v1158 = vpop.xlane.xlu0 %1157
      %v1159 = vmul.f32 %v1158, %v539
      %v1160 = vadd.f32 %v1159, 1e-12
      %v1161 = vrsqrt.pop %v1160
      %v1162 = vmul.f32 %v1154, %v1161
      %v1164 = vlaneseq
      %v1165 = vshrl.u32 %v1164, 7
      %v1166 = vsub.s32 0, %v1165
      %v1167 = vrot.slane %v1148, %v1166
      %v1169 = vmul.f32 %v1162, %v1167
      %v1171 = vlaneseq
      %v1172 = vshrl.u32 %v1171, 7
      %v1173 = vsub.s32 0, %v1172
      %v1174 = vrot.slane %v1149, %v1173
      %v1176 = vadd.f32 %v1169, %v1174
      %v1177 = vld [vmem:[%s8] sm:$0xff]
      %v1178 = vld [vmem:[%s8 + $0x8] sm:$0xff]
      %v1179 = vld [vmem:[%s8 + $0x10] sm:$0xff]
      %v1180 = vld [vmem:[%s8 + $0x18] sm:$0xff]
      %v1181 = vld [vmem:[%s9] sm:$0x1]
      %v1183 = vlaneseq
      %v1184 = vshrl.u32 %v1183, 7
      %v1185 = vsub.s32 0, %v1184
      %v1186 = vrot.slane %v1181, %v1185
      %v1189 = vsel %vm535, %v1176, 0
      %1191 = vmatprep.subr.mxu0 0.0
      %1192 = vmatpush1.msra.mxu0 %v1177
      %1193 = vmatprep.subr.mxu0 0.0
      %1194 = vmatpush1.msra.mxu0 %v1178
      %1195 = vmatprep.subr.mxu0 0.0
      %1196 = vmatpush1.msra.mxu0 %v1179
      %1197 = vmatprep.subr.mxu0 0.0
      %1198 = vmatpush1.msra.mxu0 %v1180
      %1199 = vmatprep.subr.mxu0 0.0
      %1200 = vmatpush1.msra.mxu0 0.0
      %1201 = vmatprep.subr.mxu0 0.0
      %1202 = vmatpush1.msra.mxu0 0.0
      %1203 = vmatprep.subr.mxu0 0.0
      %1204 = vmatpush1.msra.mxu0 0.0
      %1205 = vmatprep.subr.mxu0 0.0
      %1206 = vmatpush1.msra.mxu0 0.0
      %1207 = vmatprep.subr.mxu0 0.0
      %1208 = vmatpush1.msra.mxu0 0.0
      %1209 = vmatprep.subr.mxu0 0.0
      %1210 = vmatpush1.msra.mxu0 0.0
      %1211 = vmatprep.subr.mxu0 0.0
      %1212 = vmatpush1.msra.mxu0 0.0
      %1213 = vmatprep.subr.mxu0 0.0
      %1214 = vmatpush1.msra.mxu0 0.0
      %1215 = vmatprep.subr.mxu0 0.0
      %1216 = vmatpush1.msra.mxu0 0.0
      %1217 = vmatprep.subr.mxu0 0.0
      %1218 = vmatpush1.msra.mxu0 0.0
      %1219 = vmatprep.subr.mxu0 0.0
      %1220 = vmatpush1.msra.mxu0 0.0
      %1221 = vmatprep.subr.mxu0 0.0
      %1222 = vmatpush1.msra.mxu0 0.0
      %1223 = vmatprep.subr.mxu0 0.0
      %1224 = vmatpush1.msra.mxu0 0.0
      %1225 = vmatprep.subr.mxu0 0.0
      %1226 = vmatpush1.msra.mxu0 0.0
      %1227 = vmatprep.subr.mxu0 0.0
      %1228 = vmatpush1.msra.mxu0 0.0
      %1229 = vmatprep.subr.mxu0 0.0
      %1230 = vmatpush1.msra.mxu0 0.0
      %1231 = vmatprep.subr.mxu0 0.0
      %1232 = vmatpush1.msra.mxu0 0.0
      %1233 = vmatprep.subr.mxu0 0.0
      %1234 = vmatpush1.msra.mxu0 0.0
      %1235 = vmatprep.subr.mxu0 0.0
      %1236 = vmatpush1.msra.mxu0 0.0
      %1237 = vmatprep.subr.mxu0 0.0
      %1238 = vmatpush1.msra.mxu0 0.0
      %1239 = vmatprep.subr.mxu0 0.0
      %1240 = vmatpush1.msra.mxu0 0.0
      %1241 = vmatprep.subr.mxu0 0.0
      %1242 = vmatpush1.msra.mxu0 0.0
      %1243 = vmatprep.subr.mxu0 0.0
      %1244 = vmatpush1.msra.mxu0 0.0
      %1245 = vmatprep.subr.mxu0 0.0
      %1246 = vmatpush1.msra.mxu0 0.0
      %1247 = vmatprep.subr.mxu0 0.0
      %1248 = vmatpush1.msra.mxu0 0.0
      %1249 = vmatprep.subr.mxu0 0.0
      %1250 = vmatpush1.msra.mxu0 0.0
      %1251 = vmatprep.subr.mxu0 0.0
      %1252 = vmatpush1.msra.mxu0 0.0
      %1253 = vmatprep.subr.mxu0 0.0
      %1254 = vmatpush1.msra.mxu0 0.0
      %1255 = vmatprep.mubr.f32.mxu0 0.0
      %1256 = vmatmul.mubr.f32.gmra.mrb[0].mxu0 %v1189
      %v1257 = vpop.f32.mrb[0].mxu0
      %v1258 = vadd.f32 %v1186, %v1257
      %v1259 = vpop.f32.mrb[0].mxu0
      %1260 = vdwg.mxu0
      %v1261 = vmul.f32 %v1258, 0.5
      %v1262 = vmul.f32 %v1258, 0.044715
      %v1263 = vmul.f32 %v1262, %v1258
      %v1264 = vmul.f32 %v1263, %v1258
      %v1265 = vadd.f32 %v1258, %v1264
      %v1266 = vmul.f32 %v1265, 0.7978846
      %v1267 = vtanh.pop %v1266
      %v1268 = vadd.f32 %v1267, 1.0
      %v1269 = vmul.f32 %v1261, %v1268
      %v1270 = vld [vmem:[%s10] sm:$0xff]
      %v1271 = vld [vmem:[%s10 + $0x8] sm:$0xff]
      %v1272 = vld [vmem:[%s10 + $0x10] sm:$0xff]
      %v1273 = vld [vmem:[%s10 + $0x18] sm:$0xff]
      %v1274 = vld [vmem:[%s10 + $0x20] sm:$0xff]
      %v1275 = vld [vmem:[%s10 + $0x28] sm:$0xff]
      %v1276 = vld [vmem:[%s10 + $0x30] sm:$0xff]
      %v1277 = vld [vmem:[%s10 + $0x38] sm:$0xff]
      %v1278 = vld [vmem:[%s11] sm:$0x1]
      %v1280 = vlaneseq
      %v1281 = vshrl.u32 %v1280, 7
      %v1282 = vsub.s32 0, %v1281
      %v1283 = vrot.slane %v1278, %v1282
      %vm1285 = vcmask 523264
      %v1287 = vsel %vm1285, %v1269, 0
      %1289 = vmatprep.subr.mxu0 0.0
      %1290 = vmatpush1.msra.mxu0 %v1270
      %1291 = vmatprep.subr.mxu0 0.0
      %1292 = vmatpush1.msra.mxu0 %v1271
      %1293 = vmatprep.subr.mxu0 0.0
      %1294 = vmatpush1.msra.mxu0 %v1272
      %1295 = vmatprep.subr.mxu0 0.0
      %1296 = vmatpush1.msra.mxu0 %v1273
      %1297 = vmatprep.subr.mxu0 0.0
      %1298 = vmatpush1.msra.mxu0 %v1274
      %1299 = vmatprep.subr.mxu0 0.0
      %1300 = vmatpush1.msra.mxu0 %v1275
      %1301 = vmatprep.subr.mxu0 0.0
      %1302 = vmatpush1.msra.mxu0 %v1276
      %1303 = vmatprep.subr.mxu0 0.0
      %1304 = vmatpush1.msra.mxu0 %v1277
      %1305 = vmatprep.subr.mxu0 0.0
      %1306 = vmatpush1.msra.mxu0 0.0
      %1307 = vmatprep.subr.mxu0 0.0
      %1308 = vmatpush1.msra.mxu0 0.0
      %1309 = vmatprep.subr.mxu0 0.0
      %1310 = vmatpush1.msra.mxu0 0.0
      %1311 = vmatprep.subr.mxu0 0.0
      %1312 = vmatpush1.msra.mxu0 0.0
      %1313 = vmatprep.subr.mxu0 0.0
      %1314 = vmatpush1.msra.mxu0 0.0
      %1315 = vmatprep.subr.mxu0 0.0
      %1316 = vmatpush1.msra.mxu0 0.0
      %1317 = vmatprep.subr.mxu0 0.0
      %1318 = vmatpush1.msra.mxu0 0.0
      %1319 = vmatprep.subr.mxu0 0.0
      %1320 = vmatpush1.msra.mxu0 0.0
      %1321 = vmatprep.subr.mxu0 0.0
      %1322 = vmatpush1.msra.mxu0 0.0
      %1323 = vmatprep.subr.mxu0 0.0
      %1324 = vmatpush1.msra.mxu0 0.0
      %1325 = vmatprep.subr.mxu0 0.0
      %1326 = vmatpush1.msra.mxu0 0.0
      %1327 = vmatprep.subr.mxu0 0.0
      %1328 = vmatpush1.msra.mxu0 0.0
      %1329 = vmatprep.subr.mxu0 0.0
      %1330 = vmatpush1.msra.mxu0 0.0
      %1331 = vmatprep.subr.mxu0 0.0
      %1332 = vmatpush1.msra.mxu0 0.0
      %1333 = vmatprep.subr.mxu0 0.0
      %1334 = vmatpush1.msra.mxu0 0.0
      %1335 = vmatprep.subr.mxu0 0.0
      %1336 = vmatpush1.msra.mxu0 0.0
      %1337 = vmatprep.subr.mxu0 0.0
      %1338 = vmatpush1.msra.mxu0 0.0
      %1339 = vmatprep.subr.mxu0 0.0
      %1340 = vmatpush1.msra.mxu0 0.0
      %1341 = vmatprep.subr.mxu0 0.0
      %1342 = vmatpush1.msra.mxu0 0.0
      %1343 = vmatprep.subr.mxu0 0.0
      %1344 = vmatpush1.msra.mxu0 0.0
      %1345 = vmatprep.subr.mxu0 0.0
      %1346 = vmatpush1.msra.mxu0 0.0
      %1347 = vmatprep.subr.mxu0 0.0
      %1348 = vmatpush1.msra.mxu0 0.0
      %1349 = vmatprep.subr.mxu0 0.0
      %1350 = vmatpush1.msra.mxu0 0.0
      %1351 = vmatprep.subr.mxu0 0.0
      %1352 = vmatpush1.msra.mxu0 0.0
      %1353 = vmatprep.mubr.f32.mxu0 0.0
      %1354 = vmatmul.mubr.f32.gmra.mrb[0].mxu0 %v1287
      %v1355 = vpop.f32.mrb[0].mxu0
      %v1356 = vadd.f32 %v1283, %v1355
      %v1357 = vpop.f32.mrb[0].mxu0
      %1358 = vdwg.mxu0
      %v1359 = vadd.f32 %v1356, %v1176
      %v1360 = vld [vmem:[%s12] sm:$0x1]
      %v1361 = vld [vmem:[%s13] sm:$0x1]
      %v1362 = vsel %vm535, %v1359, 0.0
      %1363 = vadd.xlane.f32.xlu0 %v1362
      %v1364 = vpop.xlane.xlu0 %1363
      %v1365 = vmul.f32 %v1364, %v539
      %v1366 = vsub.f32 %v1359, %v1365
      %v1367 = vmul.f32 %v1366, %v1366
      %v1368 = vsel %vm535, %v1367, 0.0
      %1369 = vadd.xlane.f32.xlu0 %v1368
      %v1370 = vpop.xlane.xlu0 %1369
      %v1371 = vmul.f32 %v1370, %v539
      %v1372 = vadd.f32 %v1371, 1e-12
      %v1373 = vrsqrt.pop %v1372
      %v1374 = vmul.f32 %v1366, %v1373
      %v1376 = vlaneseq
      %v1377 = vshrl.u32 %v1376, 7
      %v1378 = vsub.s32 0, %v1377
      %v1379 = vrot.slane %v1360, %v1378
      %v1381 = vmul.f32 %v1374, %v1379
      %v1383 = vlaneseq
      %v1384 = vshrl.u32 %v1383, 7
      %v1385 = vsub.s32 0, %v1384
      %v1386 = vrot.slane %v1361, %v1385
      %v1388 = vadd.f32 %v1381, %v1386
      %s1389 = scalar_lea.vmem %s2, 32
      %v1390 = vld [vmem:[%s1389] sm:$0xff]
      %v1391 = vld [vmem:[%s1389 + $0x8] sm:$0xff]
      %v1392 = vld [vmem:[%s1389 + $0x10] sm:$0xff]
      %v1393 = vld [vmem:[%s1389 + $0x18] sm:$0xff]
      %s1394 = scalar_lea.vmem %s3, 1
      %v1395 = vld [vmem:[%s1394] sm:$0x1]
      %v1397 = vlaneseq
      %v1398 = vshrl.u32 %v1397, 7
      %v1399 = vsub.s32 0, %v1398
      %v1400 = vrot.slane %v1395, %v1399
      %v1403 = vsel %vm535, %v1388, 0
      %1405 = vmatprep.subr.mxu0 0.0
      %1406 = vmatpush1.msra.mxu0 %v1390
      %1407 = vmatprep.subr.mxu0 0.0
      %1408 = vmatpush1.msra.mxu0 %v1391
      %1409 = vmatprep.subr.mxu0 0.0
      %1410 = vmatpush1.msra.mxu0 %v1392
      %1411 = vmatprep.subr.mxu0 0.0
      %1412 = vmatpush1.msra.mxu0 %v1393
      %1413 = vmatprep.subr.mxu0 0.0
      %1414 = vmatpush1.msra.mxu0 0.0
      %1415 = vmatprep.subr.mxu0 0.0
      %1416 = vmatpush1.msra.mxu0 0.0
      %1417 = vmatprep.subr.mxu0 0.0
      %1418 = vmatpush1.msra.mxu0 0.0
      %1419 = vmatprep.subr.mxu0 0.0
      %1420 = vmatpush1.msra.mxu0 0.0
      %1421 = vmatprep.subr.mxu0 0.0
      %1422 = vmatpush1.msra.mxu0 0.0
      %1423 = vmatprep.subr.mxu0 0.0
      %1424 = vmatpush1.msra.mxu0 0.0
      %1425 = vmatprep.subr.mxu0 0.0
      %1426 = vmatpush1.msra.mxu0 0.0
      %1427 = vmatprep.subr.mxu0 0.0
      %1428 = vmatpush1.msra.mxu0 0.0
      %1429 = vmatprep.subr.mxu0 0.0
      %1430 = vmatpush1.msra.mxu0 0.0
      %1431 = vmatprep.subr.mxu0 0.0
      %1432 = vmatpush1.msra.mxu0 0.0
      %1433 = vmatprep.subr.mxu0 0.0
      %1434 = vmatpush1.msra.mxu0 0.0
      %1435 = vmatprep.subr.mxu0 0.0
      %1436 = vmatpush1.msra.mxu0 0.0
      %1437 = vmatprep.subr.mxu0 0.0
      %1438 = vmatpush1.msra.mxu0 0.0
      %1439 = vmatprep.subr.mxu0 0.0
      %1440 = vmatpush1.msra.mxu0 0.0
      %1441 = vmatprep.subr.mxu0 0.0
      %1442 = vmatpush1.msra.mxu0 0.0
      %1443 = vmatprep.subr.mxu0 0.0
      %1444 = vmatpush1.msra.mxu0 0.0
      %1445 = vmatprep.subr.mxu0 0.0
      %1446 = vmatpush1.msra.mxu0 0.0
      %1447 = vmatprep.subr.mxu0 0.0
      %1448 = vmatpush1.msra.mxu0 0.0
      %1449 = vmatprep.subr.mxu0 0.0
      %1450 = vmatpush1.msra.mxu0 0.0
      %1451 = vmatprep.subr.mxu0 0.0
      %1452 = vmatpush1.msra.mxu0 0.0
      %1453 = vmatprep.subr.mxu0 0.0
      %1454 = vmatpush1.msra.mxu0 0.0
      %1455 = vmatprep.subr.mxu0 0.0
      %1456 = vmatpush1.msra.mxu0 0.0
      %1457 = vmatprep.subr.mxu0 0.0
      %1458 = vmatpush1.msra.mxu0 0.0
      %1459 = vmatprep.subr.mxu0 0.0
      %1460 = vmatpush1.msra.mxu0 0.0
      %1461 = vmatprep.subr.mxu0 0.0
      %1462 = vmatpush1.msra.mxu0 0.0
      %1463 = vmatprep.subr.mxu0 0.0
      %1464 = vmatpush1.msra.mxu0 0.0
      %1465 = vmatprep.subr.mxu0 0.0
      %1466 = vmatpush1.msra.mxu0 0.0
      %1467 = vmatprep.subr.mxu0 0.0
      %1468 = vmatpush1.msra.mxu0 0.0
      %1469 = vmatprep.mubr.f32.mxu0 0.0
      %1470 = vmatmul.mubr.f32.gmra.mrb[0].mxu0 %v1403
      %v1471 = vpop.f32.mrb[0].mxu0
      %v1472 = vadd.f32 %v1400, %v1471
      %v1473 = vpop.f32.mrb[0].mxu0
      %1474 = vdwg.mxu0
      %s1475 = scalar_lea.vmem %s4, 32
      %v1476 = vld [vmem:[%s1475] sm:$0xff]
      %v1477 = vld [vmem:[%s1475 + $0x8] sm:$0xff]
      %v1478 = vld [vmem:[%s1475 + $0x10] sm:$0xff]
      %v1479 = vld [vmem:[%s1475 + $0x18] sm:$0xff]
      %1481 = vrot.lane.b32.xlu0 %v1472, 96
      %v1482 = vpop.permute.xlu0 %1481
      %v1483 = vsel %vm655, %v1472, 0
      %v1485 = vsel %vm655, %v1482, 0
      %1487 = vmatprep.subr.mxu0 0.0
      %1488 = vmatpush1.xpose.msra.mxu0 %v1485
      %1489 = vmatprep.subr.mxu0 0.0
      %1490 = vmatpush1.xpose.msra.mxu0 0.0
      %1491 = vmatprep.subr.mxu0 0.0
      %1492 = vmatpush1.xpose.msra.mxu0 0.0
      %1493 = vmatprep.subr.mxu0 0.0
      %1494 = vmatpush1.xpose.msra.mxu0 0.0
      %1495 = vmatprep.subr.mxu0 0.0
      %1496 = vmatpush1.xpose.msra.mxu0 0.0
      %1497 = vmatprep.subr.mxu0 0.0
      %1498 = vmatpush1.xpose.msra.mxu0 0.0
      %1499 = vmatprep.subr.mxu0 0.0
      %1500 = vmatpush1.xpose.msra.mxu0 0.0
      %1501 = vmatprep.subr.mxu0 0.0
      %1502 = vmatpush1.xpose.msra.mxu0 0.0
      %1503 = vmatprep.subr.mxu0 0.0
      %1504 = vmatpush1.xpose.msra.mxu0 0.0
      %1505 = vmatprep.subr.mxu0 0.0
      %1506 = vmatpush1.xpose.msra.mxu0 0.0
      %1507 = vmatprep.subr.mxu0 0.0
      %1508 = vmatpush1.xpose.msra.mxu0 0.0
      %1509 = vmatprep.subr.mxu0 0.0
      %1510 = vmatpush1.xpose.msra.mxu0 0.0
      %1511 = vmatprep.subr.mxu0 0.0
      %1512 = vmatpush1.xpose.msra.mxu0 0.0
      %1513 = vmatprep.subr.mxu0 0.0
      %1514 = vmatpush1.xpose.msra.mxu0 0.0
      %1515 = vmatprep.subr.mxu0 0.0
      %1516 = vmatpush1.xpose.msra.mxu0 0.0
      %1517 = vmatprep.subr.mxu0 0.0
      %1518 = vmatpush1.xpose.msra.mxu0 0.0
      %1519 = vmatprep.subr.mxu0 0.0
      %1520 = vmatpush1.xpose.msra.mxu0 0.0
      %1521 = vmatprep.subr.mxu0 0.0
      %1522 = vmatpush1.xpose.msra.mxu0 0.0
      %1523 = vmatprep.subr.mxu0 0.0
      %1524 = vmatpush1.xpose.msra.mxu0 0.0
      %1525 = vmatprep.subr.mxu0 0.0
      %1526 = vmatpush1.xpose.msra.mxu0 0.0
      %1527 = vmatprep.subr.mxu0 0.0
      %1528 = vmatpush1.xpose.msra.mxu0 0.0
      %1529 = vmatprep.subr.mxu0 0.0
      %1530 = vmatpush1.xpose.msra.mxu0 0.0
      %1531 = vmatprep.subr.mxu0 0.0
      %1532 = vmatpush1.xpose.msra.mxu0 0.0
      %1533 = vmatprep.subr.mxu0 0.0
      %1534 = vmatpush1.xpose.msra.mxu0 0.0
      %1535 = vmatprep.subr.mxu0 0.0
      %1536 = vmatpush1.xpose.msra.mxu0 0.0
      %1537 = vmatprep.subr.mxu0 0.0
      %1538 = vmatpush1.xpose.msra.mxu0 0.0
      %1539 = vmatprep.subr.mxu0 0.0
      %1540 = vmatpush1.xpose.msra.mxu0 0.0
      %1541 = vmatprep.subr.mxu0 0.0
      %1542 = vmatpush1.xpose.msra.mxu0 0.0
      %1543 = vmatprep.subr.mxu0 0.0
      %1544 = vmatpush1.xpose.msra.mxu0 0.0
      %1545 = vmatprep.subr.mxu0 0.0
      %1546 = vmatpush1.xpose.msra.mxu0 0.0
      %1547 = vmatprep.subr.mxu0 0.0
      %1548 = vmatpush1.xpose.msra.mxu0 0.0
      %1549 = vmatprep.subr.mxu0 0.0
      %1550 = vmatpush1.xpose.msra.mxu0 0.0
      %1551 = vmatprep.mubr.f32.mxu0 0.0
      %1552 = vmatmul.mubr.f32.gmra.mrb[0].mxu0 %v1483
      %v1553 = vpop.f32.mrb[0].mxu0
      %v1554 = vadd.f32 0.0, %v1553
      %v1555 = vpop.f32.mrb[0].mxu0
      %1556 = vdwg.mxu0
      %v1557 = vmul.f32 %v1554, 0.25
      %v1558 = vadd.f32 %v1557, %v735
      %v1559 = vsel %vm738, %v1558, -inf
      %1560 = vmax.xlane.f32.xlu0 %v1559
      %v1561 = vpop.xlane.xlu0 %1560
      %v1562 = vsub.f32 %v1558, %v1561
      %v1563 = vmul.f32 %v1562, 1.442695
      %v1564 = vpow.pop %v1563
      %v1565 = vsel %vm738, %v1564, 0.0
      %1566 = vadd.xlane.f32.xlu0 %v1565
      %v1567 = vpop.xlane.xlu0 %1566
      %v1568 = vrcp.pop %v1567
      %v1569 = vmul.f32 %v1564, %v1568
      %1570 = vrot.lane.b32.xlu0 %v1472, 64
      %v1571 = vpop.permute.xlu0 %1570
      %v1574 = vsel %vm738, %v1569, 0
      %1576 = vmatprep.subr.mxu0 0.0
      %1577 = vmatpush1.msra.mxu0 %v1571
      %1578 = vmatprep.subr.mxu0 0.0
      %1579 = vmatpush1.msra.mxu0 0.0
      %1580 = vmatprep.subr.mxu0 0.0
      %1581 = vmatpush1.msra.mxu0 0.0
      %1582 = vmatprep.subr.mxu0 0.0
      %1583 = vmatpush1.msra.mxu0 0.0
      %1584 = vmatprep.subr.mxu0 0.0
      %1585 = vmatpush1.msra.mxu0 0.0
      %1586 = vmatprep.subr.mxu0 0.0
      %1587 = vmatpush1.msra.mxu0 0.0
      %1588 = vmatprep.subr.mxu0 0.0
      %1589 = vmatpush1.msra.mxu0 0.0
      %1590 = vmatprep.subr.mxu0 0.0
      %1591 = vmatpush1.msra.mxu0 0.0
      %1592 = vmatprep.subr.mxu0 0.0
      %1593 = vmatpush1.msra.mxu0 0.0
      %1594 = vmatprep.subr.mxu0 0.0
      %1595 = vmatpush1.msra.mxu0 0.0
      %1596 = vmatprep.subr.mxu0 0.0
      %1597 = vmatpush1.msra.mxu0 0.0
      %1598 = vmatprep.subr.mxu0 0.0
      %1599 = vmatpush1.msra.mxu0 0.0
      %1600 = vmatprep.subr.mxu0 0.0
      %1601 = vmatpush1.msra.mxu0 0.0
      %1602 = vmatprep.subr.mxu0 0.0
      %1603 = vmatpush1.msra.mxu0 0.0
      %1604 = vmatprep.subr.mxu0 0.0
      %1605 = vmatpush1.msra.mxu0 0.0
      %1606 = vmatprep.subr.mxu0 0.0
      %1607 = vmatpush1.msra.mxu0 0.0
      %1608 = vmatprep.subr.mxu0 0.0
      %1609 = vmatpush1.msra.mxu0 0.0
      %1610 = vmatprep.subr.mxu0 0.0
      %1611 = vmatpush1.msra.mxu0 0.0
      %1612 = vmatprep.subr.mxu0 0.0
      %1613 = vmatpush1.msra.mxu0 0.0
      %1614 = vmatprep.subr.mxu0 0.0
      %1615 = vmatpush1.msra.mxu0 0.0
      %1616 = vmatprep.subr.mxu0 0.0
      %1617 = vmatpush1.msra.mxu0 0.0
      %1618 = vmatprep.subr.mxu0 0.0
      %1619 = vmatpush1.msra.mxu0 0.0
      %1620 = vmatprep.subr.mxu0 0.0
      %1621 = vmatpush1.msra.mxu0 0.0
      %1622 = vmatprep.subr.mxu0 0.0
      %1623 = vmatpush1.msra.mxu0 0.0
      %1624 = vmatprep.subr.mxu0 0.0
      %1625 = vmatpush1.msra.mxu0 0.0
      %1626 = vmatprep.subr.mxu0 0.0
      %1627 = vmatpush1.msra.mxu0 0.0
      %1628 = vmatprep.subr.mxu0 0.0
      %1629 = vmatpush1.msra.mxu0 0.0
      %1630 = vmatprep.subr.mxu0 0.0
      %1631 = vmatpush1.msra.mxu0 0.0
      %1632 = vmatprep.subr.mxu0 0.0
      %1633 = vmatpush1.msra.mxu0 0.0
      %1634 = vmatprep.subr.mxu0 0.0
      %1635 = vmatpush1.msra.mxu0 0.0
      %1636 = vmatprep.subr.mxu0 0.0
      %1637 = vmatpush1.msra.mxu0 0.0
      %1638 = vmatprep.subr.mxu0 0.0
      %1639 = vmatpush1.msra.mxu0 0.0
      %1640 = vmatprep.mubr.f32.mxu0 0.0
      %1641 = vmatmul.mubr.f32.gmra.mrb[0].mxu0 %v1574
      %v1642 = vpop.f32.mrb[0].mxu0
      %v1643 = vadd.f32 0.0, %v1642
      %v1644 = vpop.f32.mrb[0].mxu0
      %1645 = vdwg.mxu0
      %1646 = vrot.lane.b32.xlu0 %v1472, 112
      %v1647 = vpop.permute.xlu0 %1646
      %1648 = vrot.lane.b32.xlu0 %v1472, 80
      %v1649 = vpop.permute.xlu0 %1648
      %v1650 = vsel %vm655, %v1647, 0
      %v1652 = vsel %vm655, %v1649, 0
      %1654 = vmatprep.subr.mxu0 0.0
      %1655 = vmatpush1.xpose.msra.mxu0 %v1652
      %1656 = vmatprep.subr.mxu0 0.0
      %1657 = vmatpush1.xpose.msra.mxu0 0.0
      %1658 = vmatprep.subr.mxu0 0.0
      %1659 = vmatpush1.xpose.msra.mxu0 0.0
      %1660 = vmatprep.subr.mxu0 0.0
      %1661 = vmatpush1.xpose.msra.mxu0 0.0
      %1662 = vmatprep.subr.mxu0 0.0
      %1663 = vmatpush1.xpose.msra.mxu0 0.0
      %1664 = vmatprep.subr.mxu0 0.0
      %1665 = vmatpush1.xpose.msra.mxu0 0.0
      %1666 = vmatprep.subr.mxu0 0.0
      %1667 = vmatpush1.xpose.msra.mxu0 0.0
      %1668 = vmatprep.subr.mxu0 0.0
      %1669 = vmatpush1.xpose.msra.mxu0 0.0
      %1670 = vmatprep.subr.mxu0 0.0
      %1671 = vmatpush1.xpose.msra.mxu0 0.0
      %1672 = vmatprep.subr.mxu0 0.0
      %1673 = vmatpush1.xpose.msra.mxu0 0.0
      %1674 = vmatprep.subr.mxu0 0.0
      %1675 = vmatpush1.xpose.msra.mxu0 0.0
      %1676 = vmatprep.subr.mxu0 0.0
      %1677 = vmatpush1.xpose.msra.mxu0 0.0
      %1678 = vmatprep.subr.mxu0 0.0
      %1679 = vmatpush1.xpose.msra.mxu0 0.0
      %1680 = vmatprep.subr.mxu0 0.0
      %1681 = vmatpush1.xpose.msra.mxu0 0.0
      %1682 = vmatprep.subr.mxu0 0.0
      %1683 = vmatpush1.xpose.msra.mxu0 0.0
      %1684 = vmatprep.subr.mxu0 0.0
      %1685 = vmatpush1.xpose.msra.mxu0 0.0
      %1686 = vmatprep.subr.mxu0 0.0
      %1687 = vmatpush1.xpose.msra.mxu0 0.0
      %1688 = vmatprep.subr.mxu0 0.0
      %1689 = vmatpush1.xpose.msra.mxu0 0.0
      %1690 = vmatprep.subr.mxu0 0.0
      %1691 = vmatpush1.xpose.msra.mxu0 0.0
      %1692 = vmatprep.subr.mxu0 0.0
      %1693 = vmatpush1.xpose.msra.mxu0 0.0
      %1694 = vmatprep.subr.mxu0 0.0
      %1695 = vmatpush1.xpose.msra.mxu0 0.0
      %1696 = vmatprep.subr.mxu0 0.0
      %1697 = vmatpush1.xpose.msra.mxu0 0.0
      %1698 = vmatprep.subr.mxu0 0.0
      %1699 = vmatpush1.xpose.msra.mxu0 0.0
      %1700 = vmatprep.subr.mxu0 0.0
      %1701 = vmatpush1.xpose.msra.mxu0 0.0
      %1702 = vmatprep.subr.mxu0 0.0
      %1703 = vmatpush1.xpose.msra.mxu0 0.0
      %1704 = vmatprep.subr.mxu0 0.0
      %1705 = vmatpush1.xpose.msra.mxu0 0.0
      %1706 = vmatprep.subr.mxu0 0.0
      %1707 = vmatpush1.xpose.msra.mxu0 0.0
      %1708 = vmatprep.subr.mxu0 0.0
      %1709 = vmatpush1.xpose.msra.mxu0 0.0
      %1710 = vmatprep.subr.mxu0 0.0
      %1711 = vmatpush1.xpose.msra.mxu0 0.0
      %1712 = vmatprep.subr.mxu0 0.0
      %1713 = vmatpush1.xpose.msra.mxu0 0.0
      %1714 = vmatprep.subr.mxu0 0.0
      %1715 = vmatpush1.xpose.msra.mxu0 0.0
      %1716 = vmatprep.subr.mxu0 0.0
      %1717 = vmatpush1.xpose.msra.mxu0 0.0
      %1718 = vmatprep.mubr.f32.mxu0 0.0
      %1719 = vmatmul.mubr.f32.gmra.mrb[0].mxu0 %v1650
      %v1720 = vpop.f32.mrb[0].mxu0
      %v1721 = vadd.f32 0.0, %v1720
      %v1722 = vpop.f32.mrb[0].mxu0
      %1723 = vdwg.mxu0
      %v1724 = vmul.f32 %v1721, 0.25
      %v1725 = vadd.f32 %v1724, %v735
      %v1726 = vsel %vm738, %v1725, -inf
      %1727 = vmax.xlane.f32.xlu0 %v1726
      %v1728 = vpop.xlane.xlu0 %1727
      %v1729 = vsub.f32 %v1725, %v1728
      %v1730 = vmul.f32 %v1729, 1.442695
      %v1731 = vpow.pop %v1730
      %v1732 = vsel %vm738, %v1731, 0.0
      %1733 = vadd.xlane.f32.xlu0 %v1732
      %v1734 = vpop.xlane.xlu0 %1733
      %v1735 = vrcp.pop %v1734
      %v1736 = vmul.f32 %v1731, %v1735
      %1737 = vrot.lane.b32.xlu0 %v1472, 48
      %v1738 = vpop.permute.xlu0 %1737
      %v1741 = vsel %vm738, %v1736, 0
      %1743 = vmatprep.subr.mxu0 0.0
      %1744 = vmatpush1.msra.mxu0 %v1738
      %1745 = vmatprep.subr.mxu0 0.0
      %1746 = vmatpush1.msra.mxu0 0.0
      %1747 = vmatprep.subr.mxu0 0.0
      %1748 = vmatpush1.msra.mxu0 0.0
      %1749 = vmatprep.subr.mxu0 0.0
      %1750 = vmatpush1.msra.mxu0 0.0
      %1751 = vmatprep.subr.mxu0 0.0
      %1752 = vmatpush1.msra.mxu0 0.0
      %1753 = vmatprep.subr.mxu0 0.0
      %1754 = vmatpush1.msra.mxu0 0.0
      %1755 = vmatprep.subr.mxu0 0.0
      %1756 = vmatpush1.msra.mxu0 0.0
      %1757 = vmatprep.subr.mxu0 0.0
      %1758 = vmatpush1.msra.mxu0 0.0
      %1759 = vmatprep.subr.mxu0 0.0
      %1760 = vmatpush1.msra.mxu0 0.0
      %1761 = vmatprep.subr.mxu0 0.0
      %1762 = vmatpush1.msra.mxu0 0.0
      %1763 = vmatprep.subr.mxu0 0.0
      %1764 = vmatpush1.msra.mxu0 0.0
      %1765 = vmatprep.subr.mxu0 0.0
      %1766 = vmatpush1.msra.mxu0 0.0
      %1767 = vmatprep.subr.mxu0 0.0
      %1768 = vmatpush1.msra.mxu0 0.0
      %1769 = vmatprep.subr.mxu0 0.0
      %1770 = vmatpush1.msra.mxu0 0.0
      %1771 = vmatprep.subr.mxu0 0.0
      %1772 = vmatpush1.msra.mxu0 0.0
      %1773 = vmatprep.subr.mxu0 0.0
      %1774 = vmatpush1.msra.mxu0 0.0
      %1775 = vmatprep.subr.mxu0 0.0
      %1776 = vmatpush1.msra.mxu0 0.0
      %1777 = vmatprep.subr.mxu0 0.0
      %1778 = vmatpush1.msra.mxu0 0.0
      %1779 = vmatprep.subr.mxu0 0.0
      %1780 = vmatpush1.msra.mxu0 0.0
      %1781 = vmatprep.subr.mxu0 0.0
      %1782 = vmatpush1.msra.mxu0 0.0
      %1783 = vmatprep.subr.mxu0 0.0
      %1784 = vmatpush1.msra.mxu0 0.0
      %1785 = vmatprep.subr.mxu0 0.0
      %1786 = vmatpush1.msra.mxu0 0.0
      %1787 = vmatprep.subr.mxu0 0.0
      %1788 = vmatpush1.msra.mxu0 0.0
      %1789 = vmatprep.subr.mxu0 0.0
      %1790 = vmatpush1.msra.mxu0 0.0
      %1791 = vmatprep.subr.mxu0 0.0
      %1792 = vmatpush1.msra.mxu0 0.0
      %1793 = vmatprep.subr.mxu0 0.0
      %1794 = vmatpush1.msra.mxu0 0.0
      %1795 = vmatprep.subr.mxu0 0.0
      %1796 = vmatpush1.msra.mxu0 0.0
      %1797 = vmatprep.subr.mxu0 0.0
      %1798 = vmatpush1.msra.mxu0 0.0
      %1799 = vmatprep.subr.mxu0 0.0
      %1800 = vmatpush1.msra.mxu0 0.0
      %1801 = vmatprep.subr.mxu0 0.0
      %1802 = vmatpush1.msra.mxu0 0.0
      %1803 = vmatprep.subr.mxu0 0.0
      %1804 = vmatpush1.msra.mxu0 0.0
      %1805 = vmatprep.subr.mxu0 0.0
      %1806 = vmatpush1.msra.mxu0 0.0
      %1807 = vmatprep.mubr.f32.mxu0 0.0
      %1808 = vmatmul.mubr.f32.gmra.mrb[0].mxu0 %v1741
      %v1809 = vpop.f32.mrb[0].mxu0
      %v1810 = vadd.f32 0.0, %v1809
      %v1811 = vpop.f32.mrb[0].mxu0
      %1812 = vdwg.mxu0
      %v1814 = vsel %vm655, %v1810, 0
      %1816 = vmatprep.subr.mxu0 0.0
      %1817 = vmatpush1.msra.mxu0 %v1478
      %1818 = vmatprep.subr.mxu0 0.0
      %1819 = vmatpush1.msra.mxu0 %v1479
      %1820 = vmatprep.subr.mxu0 0.0
      %1821 = vmatpush1.msra.mxu0 0.0
      %1822 = vmatprep.subr.mxu0 0.0
      %1823 = vmatpush1.msra.mxu0 0.0
      %1824 = vmatprep.subr.mxu0 0.0
      %1825 = vmatpush1.msra.mxu0 0.0
      %1826 = vmatprep.subr.mxu0 0.0
      %1827 = vmatpush1.msra.mxu0 0.0
      %1828 = vmatprep.subr.mxu0 0.0
      %1829 = vmatpush1.msra.mxu0 0.0
      %1830 = vmatprep.subr.mxu0 0.0
      %1831 = vmatpush1.msra.mxu0 0.0
      %1832 = vmatprep.subr.mxu0 0.0
      %1833 = vmatpush1.msra.mxu0 0.0
      %1834 = vmatprep.subr.mxu0 0.0
      %1835 = vmatpush1.msra.mxu0 0.0
      %1836 = vmatprep.subr.mxu0 0.0
      %1837 = vmatpush1.msra.mxu0 0.0
      %1838 = vmatprep.subr.mxu0 0.0
      %1839 = vmatpush1.msra.mxu0 0.0
      %1840 = vmatprep.subr.mxu0 0.0
      %1841 = vmatpush1.msra.mxu0 0.0
      %1842 = vmatprep.subr.mxu0 0.0
      %1843 = vmatpush1.msra.mxu0 0.0
      %1844 = vmatprep.subr.mxu0 0.0
      %1845 = vmatpush1.msra.mxu0 0.0
      %1846 = vmatprep.subr.mxu0 0.0
      %1847 = vmatpush1.msra.mxu0 0.0
      %1848 = vmatprep.subr.mxu0 0.0
      %1849 = vmatpush1.msra.mxu0 0.0
      %1850 = vmatprep.subr.mxu0 0.0
      %1851 = vmatpush1.msra.mxu0 0.0
      %1852 = vmatprep.subr.mxu0 0.0
      %1853 = vmatpush1.msra.mxu0 0.0
      %1854 = vmatprep.subr.mxu0 0.0
      %1855 = vmatpush1.msra.mxu0 0.0
      %1856 = vmatprep.subr.mxu0 0.0
      %1857 = vmatpush1.msra.mxu0 0.0
      %1858 = vmatprep.subr.mxu0 0.0
      %1859 = vmatpush1.msra.mxu0 0.0
      %1860 = vmatprep.subr.mxu0 0.0
      %1861 = vmatpush1.msra.mxu0 0.0
      %1862 = vmatprep.subr.mxu0 0.0
      %1863 = vmatpush1.msra.mxu0 0.0
      %1864 = vmatprep.subr.mxu0 0.0
      %1865 = vmatpush1.msra.mxu0 0.0
      %1866 = vmatprep.subr.mxu0 0.0
      %1867 = vmatpush1.msra.mxu0 0.0
      %1868 = vmatprep.subr.mxu0 0.0
      %1869 = vmatpush1.msra.mxu0 0.0
      %1870 = vmatprep.subr.mxu0 0.0
      %1871 = vmatpush1.msra.mxu0 0.0
      %1872 = vmatprep.subr.mxu0 0.0
      %1873 = vmatpush1.msra.mxu0 0.0
      %1874 = vmatprep.subr.mxu0 0.0
      %1875 = vmatpush1.msra.mxu0 0.0
      %1876 = vmatprep.subr.mxu0 0.0
      %1877 = vmatpush1.msra.mxu0 0.0
      %1878 = vmatprep.subr.mxu0 0.0
      %1879 = vmatpush1.msra.mxu0 0.0
      %1880 = vmatprep.mubr.f32.mxu0 0.0
      %1881 = vmatmul.mubr.f32.gmra.mrb[0].mxu0 %v1814
      %v1882 = vpop.f32.mrb[0].mxu0
      %v1883 = vadd.f32 0.0, %v1882
      %v1884 = vpop.f32.mrb[0].mxu0
      %1885 = vdwg.mxu0
      %v1887 = vsel %vm655, %v1643, 0
      %1889 = vmatprep.subr.mxu0 0.0
      %1890 = vmatpush1.msra.mxu0 %v1476
      %1891 = vmatprep.subr.mxu0 0.0
      %1892 = vmatpush1.msra.mxu0 %v1477
      %1893 = vmatprep.subr.mxu0 0.0
      %1894 = vmatpush1.msra.mxu0 0.0
      %1895 = vmatprep.subr.mxu0 0.0
      %1896 = vmatpush1.msra.mxu0 0.0
      %1897 = vmatprep.subr.mxu0 0.0
      %1898 = vmatpush1.msra.mxu0 0.0
      %1899 = vmatprep.subr.mxu0 0.0
      %1900 = vmatpush1.msra.mxu0 0.0
      %1901 = vmatprep.subr.mxu0 0.0
      %1902 = vmatpush1.msra.mxu0 0.0
      %1903 = vmatprep.subr.mxu0 0.0
      %1904 = vmatpush1.msra.mxu0 0.0
      %1905 = vmatprep.subr.mxu0 0.0
      %1906 = vmatpush1.msra.mxu0 0.0
      %1907 = vmatprep.subr.mxu0 0.0
      %1908 = vmatpush1.msra.mxu0 0.0
      %1909 = vmatprep.subr.mxu0 0.0
      %1910 = vmatpush1.msra.mxu0 0.0
      %1911 = vmatprep.subr.mxu0 0.0
      %1912 = vmatpush1.msra.mxu0 0.0
      %1913 = vmatprep.subr.mxu0 0.0
      %1914 = vmatpush1.msra.mxu0 0.0
      %1915 = vmatprep.subr.mxu0 0.0
      %1916 = vmatpush1.msra.mxu0 0.0
      %1917 = vmatprep.subr.mxu0 0.0
      %1918 = vmatpush1.msra.mxu0 0.0
      %1919 = vmatprep.subr.mxu0 0.0
      %1920 = vmatpush1.msra.mxu0 0.0
      %1921 = vmatprep.subr.mxu0 0.0
      %1922 = vmatpush1.msra.mxu0 0.0
      %1923 = vmatprep.subr.mxu0 0.0
      %1924 = vmatpush1.msra.mxu0 0.0
      %1925 = vmatprep.subr.mxu0 0.0
      %1926 = vmatpush1.msra.mxu0 0.0
      %1927 = vmatprep.subr.mxu0 0.0
      %1928 = vmatpush1.msra.mxu0 0.0
      %1929 = vmatprep.subr.mxu0 0.0
      %1930 = vmatpush1.msra.mxu0 0.0
      %1931 = vmatprep.subr.mxu0 0.0
      %1932 = vmatpush1.msra.mxu0 0.0
      %1933 = vmatprep.subr.mxu0 0.0
      %1934 = vmatpush1.msra.mxu0 0.0
      %1935 = vmatprep.subr.mxu0 0.0
      %1936 = vmatpush1.msra.mxu0 0.0
      %1937 = vmatprep.subr.mxu0 0.0
      %1938 = vmatpush1.msra.mxu0 0.0
      %1939 = vmatprep.subr.mxu0 0.0
      %1940 = vmatpush1.msra.mxu0 0.0
      %1941 = vmatprep.subr.mxu0 0.0
      %1942 = vmatpush1.msra.mxu0 0.0
      %1943 = vmatprep.subr.mxu0 0.0
      %1944 = vmatpush1.msra.mxu0 0.0
      %1945 = vmatprep.subr.mxu0 0.0
      %1946 = vmatpush1.msra.mxu0 0.0
      %1947 = vmatprep.subr.mxu0 0.0
      %1948 = vmatpush1.msra.mxu0 0.0
      %1949 = vmatprep.subr.mxu0 0.0
      %1950 = vmatpush1.msra.mxu0 0.0
      %1951 = vmatprep.subr.mxu0 0.0
      %1952 = vmatpush1.msra.mxu0 0.0
      %1953 = vmatprep.mubr.f32.mxu0 0.0
      %1954 = vmatmul.mubr.f32.gmra.mrb[0].mxu0 %v1887
      %v1955 = vpop.f32.mrb[0].mxu0
      %v1956 = vadd.f32 %v1883, %v1955
      %v1957 = vpop.f32.mrb[0].mxu0
      %1958 = vdwg.mxu0
      %s1959 = scalar_lea.vmem %s5, 1
      %v1960 = vld [vmem:[%s1959] sm:$0x1]
      %v1962 = vlaneseq
      %v1963 = vshrl.u32 %v1962, 7
      %v1964 = vsub.s32 0, %v1963
      %v1965 = vrot.slane %v1960, %v1964
      %v1967 = vadd.f32 %v1956, %v1965
      %v1968 = vadd.f32 %v1967, %v1388
      %s1969 = scalar_lea.vmem %s6, 1
      %v1970 = vld [vmem:[%s1969] sm:$0x1]
      %s1971 = scalar_lea.vmem %s7, 1
      %v1972 = vld [vmem:[%s1971] sm:$0x1]
      %v1973 = vsel %vm535, %v1968, 0.0
      %1974 = vadd.xlane.f32.xlu0 %v1973
      %v1975 = vpop.xlane.xlu0 %1974
      %v1976 = vmul.f32 %v1975, %v539
      %v1977 = vsub.f32 %v1968, %v1976
      %v1978 = vmul.f32 %v1977, %v1977
      %v1979 = vsel %vm535, %v1978, 0.0
      %1980 = vadd.xlane.f32.xlu0 %v1979
      %v1981 = vpop.xlane.xlu0 %1980
      %v1982 = vmul.f32 %v1981, %v539
      %v1983 = vadd.f32 %v1982, 1e-12
      %v1984 = vrsqrt.pop %v1983
      %v1985 = vmul.f32 %v1977, %v1984
      %v1987 = vlaneseq
      %v1988 = vshrl.u32 %v1987, 7
      %v1989 = vsub.s32 0, %v1988
      %v1990 = vrot.slane %v1970, %v1989
      %v1992 = vmul.f32 %v1985, %v1990
      %v1994 = vlaneseq
      %v1995 = vshrl.u32 %v1994, 7
      %v1996 = vsub.s32 0, %v1995
      %v1997 = vrot.slane %v1972, %v1996
      %v1999 = vadd.f32 %v1992, %v1997
      %s2000 = scalar_lea.vmem %s8, 32
      %v2001 = vld [vmem:[%s2000] sm:$0xff]
      %v2002 = vld [vmem:[%s2000 + $0x8] sm:$0xff]
      %v2003 = vld [vmem:[%s2000 + $0x10] sm:$0xff]
      %v2004 = vld [vmem:[%s2000 + $0x18] sm:$0xff]
      %s2005 = scalar_lea.vmem %s9, 1
      %v2006 = vld [vmem:[%s2005] sm:$0x1]
      %v2008 = vlaneseq
      %v2009 = vshrl.u32 %v2008, 7
      %v2010 = vsub.s32 0, %v2009
      %v2011 = vrot.slane %v2006, %v2010
      %v2014 = vsel %vm535, %v1999, 0
      %2016 = vmatprep.subr.mxu0 0.0
      %2017 = vmatpush1.msra.mxu0 %v2001
      %2018 = vmatprep.subr.mxu0 0.0
      %2019 = vmatpush1.msra.mxu0 %v2002
      %2020 = vmatprep.subr.mxu0 0.0
      %2021 = vmatpush1.msra.mxu0 %v2003
      %2022 = vmatprep.subr.mxu0 0.0
      %2023 = vmatpush1.msra.mxu0 %v2004
      %2024 = vmatprep.subr.mxu0 0.0
      %2025 = vmatpush1.msra.mxu0 0.0
      %2026 = vmatprep.subr.mxu0 0.0
      %2027 = vmatpush1.msra.mxu0 0.0
      %2028 = vmatprep.subr.mxu0 0.0
      %2029 = vmatpush1.msra.mxu0 0.0
      %2030 = vmatprep.subr.mxu0 0.0
      %2031 = vmatpush1.msra.mxu0 0.0
      %2032 = vmatprep.subr.mxu0 0.0
      %2033 = vmatpush1.msra.mxu0 0.0
      %2034 = vmatprep.subr.mxu0 0.0
      %2035 = vmatpush1.msra.mxu0 0.0
      %2036 = vmatprep.subr.mxu0 0.0
      %2037 = vmatpush1.msra.mxu0 0.0
      %2038 = vmatprep.subr.mxu0 0.0
      %2039 = vmatpush1.msra.mxu0 0.0
      %2040 = vmatprep.subr.mxu0 0.0
      %2041 = vmatpush1.msra.mxu0 0.0
      %2042 = vmatprep.subr.mxu0 0.0
      %2043 = vmatpush1.msra.mxu0 0.0
      %2044 = vmatprep.subr.mxu0 0.0
      %2045 = vmatpush1.msra.mxu0 0.0
      %2046 = vmatprep.subr.mxu0 0.0
      %2047 = vmatpush1.msra.mxu0 0.0
      %2048 = vmatprep.subr.mxu0 0.0
      %2049 = vmatpush1.msra.mxu0 0.0
      %2050 = vmatprep.subr.mxu0 0.0
      %2051 = vmatpush1.msra.mxu0 0.0
      %2052 = vmatprep.subr.mxu0 0.0
      %2053 = vmatpush1.msra.mxu0 0.0
      %2054 = vmatprep.subr.mxu0 0.0
      %2055 = vmatpush1.msra.mxu0 0.0
      %2056 = vmatprep.subr.mxu0 0.0
      %2057 = vmatpush1.msra.mxu0 0.0
      %2058 = vmatprep.subr.mxu0 0.0
      %2059 = vmatpush1.msra.mxu0 0.0
      %2060 = vmatprep.subr.mxu0 0.0
      %2061 = vmatpush1.msra.mxu0 0.0
      %2062 = vmatprep.subr.mxu0 0.0
      %2063 = vmatpush1.msra.mxu0 0.0
      %2064 = vmatprep.subr.mxu0 0.0
      %2065 = vmatpush1.msra.mxu0 0.0
      %2066 = vmatprep.subr.mxu0 0.0
      %2067 = vmatpush1.msra.mxu0 0.0
      %2068 = vmatprep.subr.mxu0 0.0
      %2069 = vmatpush1.msra.mxu0 0.0
      %2070 = vmatprep.subr.mxu0 0.0
      %2071 = vmatpush1.msra.mxu0 0.0
      %2072 = vmatprep.subr.mxu0 0.0
      %2073 = vmatpush1.msra.mxu0 0.0
      %2074 = vmatprep.subr.mxu0 0.0
      %2075 = vmatpush1.msra.mxu0 0.0
      %2076 = vmatprep.subr.mxu0 0.0
      %2077 = vmatpush1.msra.mxu0 0.0
      %2078 = vmatprep.subr.mxu0 0.0
      %2079 = vmatpush1.msra.mxu0 0.0
      %2080 = vmatprep.mubr.f32.mxu0 0.0
      %2081 = vmatmul.mubr.f32.gmra.mrb[0].mxu0 %v2014
      %v2082 = vpop.f32.mrb[0].mxu0
      %v2083 = vadd.f32 %v2011, %v2082
      %v2084 = vpop.f32.mrb[0].mxu0
      %2085 = vdwg.mxu0
      %v2086 = vmul.f32 %v2083, 0.5
      %v2087 = vmul.f32 %v2083, 0.044715
      %v2088 = vmul.f32 %v2087, %v2083
      %v2089 = vmul.f32 %v2088, %v2083
      %v2090 = vadd.f32 %v2083, %v2089
      %v2091 = vmul.f32 %v2090, 0.7978846
      %v2092 = vtanh.pop %v2091
      %v2093 = vadd.f32 %v2092, 1.0
      %v2094 = vmul.f32 %v2086, %v2093
      %s2095 = scalar_lea.vmem %s10, 64
      %v2096 = vld [vmem:[%s2095] sm:$0xff]
      %v2097 = vld [vmem:[%s2095 + $0x8] sm:$0xff]
      %v2098 = vld [vmem:[%s2095 + $0x10] sm:$0xff]
      %v2099 = vld [vmem:[%s2095 + $0x18] sm:$0xff]
      %v2100 = vld [vmem:[%s2095 + $0x20] sm:$0xff]
      %v2101 = vld [vmem:[%s2095 + $0x28] sm:$0xff]
      %v2102 = vld [vmem:[%s2095 + $0x30] sm:$0xff]
      %v2103 = vld [vmem:[%s2095 + $0x38] sm:$0xff]
      %s2104 = scalar_lea.vmem %s11, 1
      %v2105 = vld [vmem:[%s2104] sm:$0x1]
      %v2107 = vlaneseq
      %v2108 = vshrl.u32 %v2107, 7
      %v2109 = vsub.s32 0, %v2108
      %v2110 = vrot.slane %v2105, %v2109
      %v2113 = vsel %vm1285, %v2094, 0
      %2115 = vmatprep.subr.mxu0 0.0
      %2116 = vmatpush1.msra.mxu0 %v2096
      %2117 = vmatprep.subr.mxu0 0.0
      %2118 = vmatpush1.msra.mxu0 %v2097
      %2119 = vmatprep.subr.mxu0 0.0
      %2120 = vmatpush1.msra.mxu0 %v2098
      %2121 = vmatprep.subr.mxu0 0.0
      %2122 = vmatpush1.msra.mxu0 %v2099
      %2123 = vmatprep.subr.mxu0 0.0
      %2124 = vmatpush1.msra.mxu0 %v2100
      %2125 = vmatprep.subr.mxu0 0.0
      %2126 = vmatpush1.msra.mxu0 %v2101
      %2127 = vmatprep.subr.mxu0 0.0
      %2128 = vmatpush1.msra.mxu0 %v2102
      %2129 = vmatprep.subr.mxu0 0.0
      %2130 = vmatpush1.msra.mxu0 %v2103
      %2131 = vmatprep.subr.mxu0 0.0
      %2132 = vmatpush1.msra.mxu0 0.0
      %2133 = vmatprep.subr.mxu0 0.0
      %2134 = vmatpush1.msra.mxu0 0.0
      %2135 = vmatprep.subr.mxu0 0.0
      %2136 = vmatpush1.msra.mxu0 0.0
      %2137 = vmatprep.subr.mxu0 0.0
      %2138 = vmatpush1.msra.mxu0 0.0
      %2139 = vmatprep.subr.mxu0 0.0
      %2140 = vmatpush1.msra.mxu0 0.0
      %2141 = vmatprep.subr.mxu0 0.0
      %2142 = vmatpush1.msra.mxu0 0.0
      %2143 = vmatprep.subr.mxu0 0.0
      %2144 = vmatpush1.msra.mxu0 0.0
      %2145 = vmatprep.subr.mxu0 0.0
      %2146 = vmatpush1.msra.mxu0 0.0
      %2147 = vmatprep.subr.mxu0 0.0
      %2148 = vmatpush1.msra.mxu0 0.0
      %2149 = vmatprep.subr.mxu0 0.0
      %2150 = vmatpush1.msra.mxu0 0.0
      %2151 = vmatprep.subr.mxu0 0.0
      %2152 = vmatpush1.msra.mxu0 0.0
      %2153 = vmatprep.subr.mxu0 0.0
      %2154 = vmatpush1.msra.mxu0 0.0
      %2155 = vmatprep.subr.mxu0 0.0
      %2156 = vmatpush1.msra.mxu0 0.0
      %2157 = vmatprep.subr.mxu0 0.0
      %2158 = vmatpush1.msra.mxu0 0.0
      %2159 = vmatprep.subr.mxu0 0.0
      %2160 = vmatpush1.msra.mxu0 0.0
      %2161 = vmatprep.subr.mxu0 0.0
      %2162 = vmatpush1.msra.mxu0 0.0
      %2163 = vmatprep.subr.mxu0 0.0
      %2164 = vmatpush1.msra.mxu0 0.0
      %2165 = vmatprep.subr.mxu0 0.0
      %2166 = vmatpush1.msra.mxu0 0.0
      %2167 = vmatprep.subr.mxu0 0.0
      %2168 = vmatpush1.msra.mxu0 0.0
      %2169 = vmatprep.subr.mxu0 0.0
      %2170 = vmatpush1.msra.mxu0 0.0
      %2171 = vmatprep.subr.mxu0 0.0
      %2172 = vmatpush1.msra.mxu0 0.0
      %2173 = vmatprep.subr.mxu0 0.0
      %2174 = vmatpush1.msra.mxu0 0.0
      %2175 = vmatprep.subr.mxu0 0.0
      %2176 = vmatpush1.msra.mxu0 0.0
      %2177 = vmatprep.subr.mxu0 0.0
      %2178 = vmatpush1.msra.mxu0 0.0
      %2179 = vmatprep.mubr.f32.mxu0 0.0
      %2180 = vmatmul.mubr.f32.gmra.mrb[0].mxu0 %v2113
      %v2181 = vpop.f32.mrb[0].mxu0
      %v2182 = vadd.f32 %v2110, %v2181
      %v2183 = vpop.f32.mrb[0].mxu0
      %2184 = vdwg.mxu0
      %v2185 = vadd.f32 %v2182, %v1999
      %s2186 = scalar_lea.vmem %s12, 1
      %v2187 = vld [vmem:[%s2186] sm:$0x1]
      %s2188 = scalar_lea.vmem %s13, 1
      %v2189 = vld [vmem:[%s2188] sm:$0x1]
      %v2190 = vsel %vm535, %v2185, 0.0
      %2191 = vadd.xlane.f32.xlu0 %v2190
      %v2192 = vpop.xlane.xlu0 %2191
      %v2193 = vmul.f32 %v2192, %v539
      %v2194 = vsub.f32 %v2185, %v2193
      %v2195 = vmul.f32 %v2194, %v2194
      %v2196 = vsel %vm535, %v2195, 0.0
      %2197 = vadd.xlane.f32.xlu0 %v2196
      %v2198 = vpop.xlane.xlu0 %2197
      %v2199 = vmul.f32 %v2198, %v539
      %v2200 = vadd.f32 %v2199, 1e-12
      %v2201 = vrsqrt.pop %v2200
      %v2202 = vmul.f32 %v2194, %v2201
      %v2204 = vlaneseq
      %v2205 = vshrl.u32 %v2204, 7
      %v2206 = vsub.s32 0, %v2205
      %v2207 = vrot.slane %v2187, %v2206
      %v2209 = vmul.f32 %v2202, %v2207
      %v2211 = vlaneseq
      %v2212 = vshrl.u32 %v2211, 7
      %v2213 = vsub.s32 0, %v2212
      %v2214 = vrot.slane %v2189, %v2213
      %v2216 = vadd.f32 %v2209, %v2214
      %2217 = vst.msk [vmem:[%s530] sm:$0xff] %vm535, %v2216
      %p2218 = scmp.lt.s32.totalorder %s27, 1
      %s2219 = scalar_select %p2218, %s27, 1
      %s2220 = smul.addr %s2219, 8
      %s2221 = scalar_lea.vmem %s16, %s2220
      // Predicated region
      $region85: #{_lambda_.1} parent=83 // pred_check
        %p2222 = pneg %p391
      $region86: #{_lambda_.1} parent=83 // pred_check_branch
        %2224 = sbr.rel (%p2222) target = $region88
      $region87: #{_lambda_.1} parent=83 // pred_region
        _
      $region88: #{_lambda_.1} parent=83 // pred_fallthru
        _
    $region84: #{_lambda_.1} parent=5 // pred_fallthru
      _
    %p2225 = scmp.le.s32.totalorder 2, %s22
    // Predicated region
    $region89: #{_lambda_.1} parent=5 // pred_check
      %p2226 = pneg %p2225
    $region90: #{_lambda_.1} parent=5 // pred_check_branch
      %2228 = sbr.rel (%p2226) target = $region92
    $region91: #{_lambda_.1} parent=5 // pred_region
      %s2229 = ssub.s32 %s22, 2
      // Predicated region
      $region93: #{_lambda_.1} parent=91 // pred_check
        %p2230 = pneg %p397
      $region94: #{_lambda_.1} parent=91 // pred_check_branch
        %2232 = sbr.rel (%p2230) target = $region96
      $region95: #{_lambda_.1} parent=91 // pred_region
        %p2233 = scmp.lt.s32.totalorder %s28, 1
        %s2234 = scalar_select %p2233, %s28, 1
        %s2235 = smul.addr %s2234, 8
        %s2236 = scalar_lea.vmem %s16, %s2235
      $region96: #{_lambda_.1} parent=91 // pred_fallthru
        _
    $region92: #{_lambda_.1} parent=5 // pred_fallthru
      _
  $region6: #{_lambda_.1} parent=0 // loop_footer
    %s26 = sadd.s32 1, %s22
  $region7: #{_lambda_.1} parent=0 // loop_footer_branch
    %21 = sbr.rel target = $region3
  $region8: #{_lambda_.1} parent=0 // loop_exit
    _

</llo_original>
